<compile_context>
chip_gen: v6e
topology: v6e:2x2x1
jax: 0.10.0
libtpu: 0.0.40
codegen_flags: <defaults>
</compile_context>

<pallas_src>
import numpy as np
import jax
import jax.numpy as jnp
from jax.experimental import pallas as pl
from jax.experimental.pallas import tpu as pltpu

A_BICUBIC = -0.75   # PyTorch's bicubic "a" coefficient
BN_EPS = 1e-5
VMEM_LIMIT = 32 * 1024 * 1024   # safe scoped-VMEM limit on v5e/v6e/v7x


def bicubic_weight_matrix(in_size, out_size, A=A_BICUBIC):
    """(out_size, in_size) matrix replicating torch bicubic, align_corners=True."""
    def c1(x):  # |x| <= 1
        return ((A + 2.0) * x - (A + 3.0)) * x * x + 1.0

    def c2(x):  # 1 < |x| < 2
        return ((A * x - 5.0 * A) * x + 8.0 * A) * x - 4.0 * A

    Wm = np.zeros((out_size, in_size), dtype=np.float64)
    for o in range(out_size):
        real = 0.0 if out_size == 1 else o * (in_size - 1) / (out_size - 1)
        ix = int(np.floor(real))
        t = real - ix
        coeffs = [c2(t + 1.0), c1(t), c1(1.0 - t), c2(2.0 - t)]
        for k, c in enumerate(coeffs):
            idx = min(max(ix - 1 + k, 0), in_size - 1)  # border clamp, like torch
            Wm[o, idx] += c
    return Wm.astype(np.float32)


def _largest_divisor_at_most(n, cap):
    cap = max(1, min(n, cap))
    for d in range(cap, 0, -1):
        if n % d == 0:
            return d
    return 1


def _largest_divisor_multiple_of(n, unit, cap):
    """Largest divisor of n that is a multiple of `unit` and <= cap, else None."""
    best = None
    d = unit
    top = min(n, cap)
    while d <= top:
        if n % d == 0:
            best = d
        d += unit
    return best


# ----------------- Kernel 1: separable bicubic upsample (unpadded) -----------------
def upsample_kernel(x_ref, wh_ref, wwt_ref, o_ref):
    # x: (Bt, H, W) f32   wh: (H2, H) bf16   wwt: (W, W2) bf16   o: (Bt, H2, W2) bf16
    Bt, H, W = x_ref.shape
    H2 = wh_ref.shape[0]
    W2 = wwt_ref.shape[1]

    x = x_ref[...].astype(jnp.bfloat16)
    # width pass: fold (Bt, H) into rows -> one big matmul  (Bt*H, W) @ (W, W2)
    t = jnp.dot(x.reshape(Bt * H, W), wwt_ref[...],
                preferred_element_type=jnp.float32)                 # (Bt*H, W2) f32
    # height pass: fold (Bt, W2) into columns  (H2, H) @ (H, Bt*W2)
    t = jnp.transpose(t.reshape(Bt, H, W2), (1, 0, 2)).reshape(H, Bt * W2)
    u = jnp.dot(wh_ref[...], t.astype(jnp.bfloat16),
                preferred_element_type=jnp.float32)                 # (H2, Bt*W2) f32
    u = jnp.transpose(u.reshape(H2, Bt, W2), (1, 0, 2))             # (Bt, H2, W2)

    o_ref[...] = u.astype(o_ref.dtype)


# ---- Kernel 2: fused 3x3 conv (single stacked-K matmul) + bias + ReLU + BN stats ----
def conv_relu_stats_kernel(u_ref, w_ref, b_ref, y_ref, sum_ref, ssq_ref, pad_ref):
    # u: (1, C_in, H2, W2) bf16   w: (co_t, 9*C_in) bf16   b: (co_t, 1) f32
    # y: (1, co_t, H2*W2) f32     sum/ssq: (1, co_t, 1) f32
    # pad_ref: VMEM scratch (C_in, H2+2, W2+2) f32
    _, C_in, H2, W2 = u_ref.shape
    S = H2 * W2

    # zero-pad (padding=1 for the 3x3 conv) entirely in VMEM -- never hits HBM.
    pad_ref[...] = jnp.zeros_like(pad_ref)
    pad_ref[:, 1:H2 + 1, 1:W2 + 1] = u_ref[0].astype(jnp.float32)
    up = pad_ref[...]                                               # (C_in, H2+2, W2+2)

    # im2col-in-VMEM: stack all 9 taps along the contraction dim -> ONE MXU matmul
    patches = jnp.concatenate(
        [up[:, kh:kh + H2, kw:kw + W2].reshape(C_in, S)
         for kh in range(3) for kw in range(3)],
        axis=0).astype(jnp.bfloat16)                                # (9*C_in, S)

    acc = jnp.dot(w_ref[...], patches,
                  preferred_element_type=jnp.float32)               # (co_t, S)
    y = jnp.maximum(acc + b_ref[...], 0.0)                          # bias + ReLU

    y_ref[0] = y
    # per-image partial BN stats in f32 (computed from the f32 accumulator)
    sum_ref[0] = jnp.sum(y, axis=1, keepdims=True)                  # (co_t, 1)
    ssq_ref[0] = jnp.sum(y * y, axis=1, keepdims=True)              # (co_t, 1)


# ----------------- Kernel 3: BatchNorm apply (per-channel affine) -----------------
def bn_apply_kernel(y_ref, scale_ref, shift_ref, o_ref):
    # y: (1, C_out, St) f32   scale/shift: (C_out, 1) f32   o aliased with y
    o_ref[0] = y_ref[0] * scale_ref[...] + shift_ref[...]


def upsamplelayer_forward(x, conv_w, conv_b, gamma, beta):
    """x: (N, C_in, H, W) f32 -> (N, C_out, 2H, 2W) f32 (training-mode BN)."""
    N, C_in, H, W = x.shape
    H2, W2 = 2 * H, 2 * W
    S = H2 * W2
    C_out = conv_w.shape[0]

    x = x.astype(jnp.float32)
    wh = jnp.asarray(bicubic_weight_matrix(H, H2)).astype(jnp.bfloat16)    # (H2, H)
    wwt = jnp.asarray(bicubic_weight_matrix(W, W2).T).astype(jnp.bfloat16)  # (W, W2)

    # ---- Kernel 1: bicubic upsample, tiled over (N*C_in) planes ----
    B = N * C_in
    xb = x.reshape(B, H, W)
    # ~10 MiB per grid step including in-kernel temporaries (~80 B per input pixel)
    bt_cap = max(1, (10 * 1024 * 1024) // (80 * H * W))
    Bt = _largest_divisor_at_most(B, bt_cap)

    u = pl.pallas_call(
        upsample_kernel,
        out_shape=jax.ShapeDtypeStruct((B, H2, W2), jnp.bfloat16),
        grid=(B // Bt,),
        in_specs=[
            pl.BlockSpec((Bt, H, W), lambda i: (i, 0, 0)),
            # interpolation matrices passed once (constant index_map), stay resident
            pl.BlockSpec((H2, H), lambda i: (0, 0)),
            pl.BlockSpec((W, W2), lambda i: (0, 0)),
        ],
        out_specs=pl.BlockSpec((Bt, H2, W2), lambda i: (i, 0, 0)),
        compiler_params=pltpu.CompilerParams(
            dimension_semantics=("parallel",),
            vmem_limit_bytes=VMEM_LIMIT),
    )(xb, wh, wwt)
    u = u.reshape(N, C_in, H2, W2)

    # ---- Kernel 2: fused conv (stacked-K matmul) + bias + ReLU + BN partial stats ----
    # weight layout: row o, column (kh*3 + kw)*C_in + c  <- matches patch stacking order
    wk = jnp.transpose(conv_w.astype(jnp.float32), (0, 2, 3, 1)) \
            .reshape(C_out, 9 * C_in).astype(jnp.bfloat16)
    bcol = conv_b.astype(jnp.float32).reshape(C_out, 1)

    co_t = _largest_divisor_multiple_of(C_out, 8, 256) or C_out
    n_co = C_out // co_t

    y, ysum, ysq = pl.pallas_call(
        conv_relu_stats_kernel,
        out_shape=(jax.ShapeDtypeStruct((N, C_out, S), jnp.float32),
                   jax.ShapeDtypeStruct((N, C_out, 1), jnp.float32),
                   jax.ShapeDtypeStruct((N, C_out, 1), jnp.float32)),
        grid=(N, n_co),
        in_specs=[
            pl.BlockSpec((1, C_in, H2, W2), lambda n, c: (n, 0, 0, 0)),
            pl.BlockSpec((co_t, 9 * C_in), lambda n, c: (c, 0)),
            pl.BlockSpec((co_t, 1), lambda n, c: (c, 0)),
        ],
        out_specs=(
            pl.BlockSpec((1, co_t, S), lambda n, c: (n, c, 0)),
            pl.BlockSpec((1, co_t, 1), lambda n, c: (n, c, 0)),
            pl.BlockSpec((1, co_t, 1), lambda n, c: (n, c, 0)),
        ),
        scratch_shapes=[pltpu.VMEM((C_in, H2 + 2, W2 + 2), jnp.float32)],
        compiler_params=pltpu.CompilerParams(
            dimension_semantics=("parallel", "parallel"),
            vmem_limit_bytes=VMEM_LIMIT),
    )(u, wk, bcol)

    # ---- global BN statistics (training mode, biased variance): tiny JAX glue ----
    # NOTE: E[y^2] - mean^2 in f32 with clamp; stats come from the f32 accumulator.
    m = float(N * S)
    mean = jnp.sum(ysum[:, :, 0], axis=0) / m                       # (C_out,)
    var = jnp.maximum(jnp.sum(ysq[:, :, 0], axis=0) / m - mean * mean, 0.0)
    scale = gamma.astype(jnp.float32) * jax.lax.rsqrt(var + BN_EPS)
    shift = beta.astype(jnp.float32) - mean * scale

    # ---- Kernel 3: apply per-channel normalization (aliased in-place over y) ----
    st = _largest_divisor_multiple_of(S, 128, 32768) or S
    n_st = S // st

    out = pl.pallas_call(
        bn_apply_kernel,
        out_shape=jax.ShapeDtypeStruct((N, C_out, S), jnp.float32),
        grid=(N, n_st),
        in_specs=[
            pl.BlockSpec((1, C_out, st), lambda n, s: (n, 0, s)),
            pl.BlockSpec((C_out, 1), lambda n, s: (0, 0)),
            pl.BlockSpec((C_out, 1), lambda n, s: (0, 0)),
        ],
        out_specs=pl.BlockSpec((1, C_out, st), lambda n, s: (n, 0, s)),
        input_output_aliases={0: 0},
        compiler_params=pltpu.CompilerParams(
            dimension_semantics=("parallel", "parallel"),
            vmem_limit_bytes=VMEM_LIMIT),
    )(y, scale.reshape(C_out, 1), shift.reshape(C_out, 1))

    # already NCHW: just un-flatten the spatial dimension
    return out.reshape(N, C_out, H2, W2)


if __name__ == "__main__":
    # small, deterministic example shapes: N=2, C_in=4, C_out=8, H=W=16
    N, C_in, C_out, H, W = 2, 4, 8, 16, 16
    key = jax.random.PRNGKey(0)
    kx, kwt, kb = jax.random.split(key, 3)

    x = jax.random.normal(kx, (N, C_in, H, W), dtype=jnp.float32)
    conv_w = 0.1 * jax.random.normal(kwt, (C_out, C_in, 3, 3), dtype=jnp.float32)
    conv_b = 0.1 * jax.random.normal(kb, (C_out,), dtype=jnp.float32)
    gamma = jnp.ones((C_out,), dtype=jnp.float32)   # BatchNorm2d default weight
    beta = jnp.zeros((C_out,), dtype=jnp.float32)   # BatchNorm2d default bias

    out = upsamplelayer_forward(x, conv_w, conv_b, gamma, beta)
    out = jax.block_until_ready(out)
    assert out.shape == (N, C_out, 2 * H, 2 * W)
    assert bool(jnp.all(jnp.isfinite(out)))
    print("KERNEL_OK")
</pallas_src>

<mosaic_0001>
module attributes {stable_mosaic.version = 11 : i64} {
  func.func @upsample_kernel(%arg0: i32, %arg1: memref<8x16x16xf32, #tpu.memory_space<vmem>>, %arg2: memref<32x16xbf16, #tpu.memory_space<vmem>>, %arg3: memref<16x32xbf16, #tpu.memory_space<vmem>>, %arg4: memref<8x32x32xbf16, #tpu.memory_space<vmem>>) attributes {dimension_semantics = [#tpu.dimension_semantics<parallel>], iteration_bounds = array<i64: 1>, scalar_prefetch = 0 : i64, scratch_operands = 0 : i64, tpu.core_type = #tpu.core_type<tc>, window_params = [{transform_indices = @transform_0, window_bounds = array<i64: 8, 16, 16>}, {pipeline_mode = #tpu.pipeline_mode<synchronous>, transform_indices = @transform_1, window_bounds = array<i64: 32, 16>}, {pipeline_mode = #tpu.pipeline_mode<synchronous>, transform_indices = @transform_2, window_bounds = array<i64: 16, 32>}, {transform_indices = @transform_3, window_bounds = array<i64: 8, 32, 32>}]} {
    %c0 = arith.constant 0 : index
    %c0_0 = arith.constant 0 : index
    %c0_1 = arith.constant 0 : index
    %0 = vector.load %arg1[%c0, %c0_0, %c0_1] : memref<8x16x16xf32, #tpu.memory_space<vmem>>, vector<8x16x16xf32>
    %1 = arith.truncf %0 : vector<8x16x16xf32> to vector<8x16x16xbf16>
    %2 = vector.shape_cast %1 : vector<8x16x16xbf16> to vector<128x16xbf16>
    %c0_2 = arith.constant 0 : index
    %c0_3 = arith.constant 0 : index
    %3 = vector.load %arg3[%c0_2, %c0_3] : memref<16x32xbf16, #tpu.memory_space<vmem>>, vector<16x32xbf16>
    %cst = arith.constant dense<0.000000e+00> : vector<128x32xf32>
    %4 = tpu.matmul %2, %3, %cst {dimension_numbers = #tpu.dot_dimension_numbers<[1], [0], [0], [1], [0, 0, 1, 1], [], []>} : vector<128x16xbf16>, vector<16x32xbf16>, vector<128x32xf32> -> vector<128x32xf32>
    %5 = vector.shape_cast %4 : vector<128x32xf32> to vector<8x16x32xf32>
    %6 = tpu.transpose %5, [1, 0, 2] : vector<8x16x32xf32> -> vector<16x8x32xf32>
    %7 = vector.shape_cast %6 : vector<16x8x32xf32> to vector<16x256xf32>
    %c0_4 = arith.constant 0 : index
    %c0_5 = arith.constant 0 : index
    %8 = vector.load %arg2[%c0_4, %c0_5] : memref<32x16xbf16, #tpu.memory_space<vmem>>, vector<32x16xbf16>
    %9 = arith.truncf %7 : vector<16x256xf32> to vector<16x256xbf16>
    %cst_6 = arith.constant dense<0.000000e+00> : vector<32x256xf32>
    %10 = tpu.matmul %8, %9, %cst_6 {dimension_numbers = #tpu.dot_dimension_numbers<[1], [0], [0], [1], [0, 0, 1, 1], [], []>} : vector<32x16xbf16>, vector<16x256xbf16>, vector<32x256xf32> -> vector<32x256xf32>
    %11 = vector.shape_cast %10 : vector<32x256xf32> to vector<32x8x32xf32>
    %12 = tpu.transpose %11, [1, 0, 2] : vector<32x8x32xf32> -> vector<8x32x32xf32>
    %13 = arith.truncf %12 : vector<8x32x32xf32> to vector<8x32x32xbf16>
    %c0_7 = arith.constant 0 : index
    %c0_8 = arith.constant 0 : index
    %c0_9 = arith.constant 0 : index
    %14 = vector.load %arg4[%c0_7, %c0_8, %c0_9] : memref<8x32x32xbf16, #tpu.memory_space<vmem>>, vector<8x32x32xbf16>
    tpu.vector_store %arg4[%c0_7, %c0_8, %c0_9], %13 {strides = array<i32>} : memref<8x32x32xbf16, #tpu.memory_space<vmem>>, vector<8x32x32xbf16>,
    return
  }
  func.func @transform_0(%arg0: i32) -> (i32, i32, i32) {
    %c0_i32 = arith.constant 0 : i32
    %c0_i32_0 = arith.constant 0 : i32
    %c0_i32_1 = arith.constant 0 : i32
    return %arg0, %c0_i32, %c0_i32_0 : i32, i32, i32
  }
  func.func @transform_1(%arg0: i32) -> (i32, i32) {
    %c0_i32 = arith.constant 0 : i32
    %c0_i32_0 = arith.constant 0 : i32
    %c0_i32_1 = arith.constant 0 : i32
    return %c0_i32, %c0_i32_0 : i32, i32
  }
  func.func @transform_2(%arg0: i32) -> (i32, i32) {
    %c0_i32 = arith.constant 0 : i32
    %c0_i32_0 = arith.constant 0 : i32
    %c0_i32_1 = arith.constant 0 : i32
    return %c0_i32, %c0_i32_0 : i32, i32
  }
  func.func @transform_3(%arg0: i32) -> (i32, i32, i32) {
    %c0_i32 = arith.constant 0 : i32
    %c0_i32_0 = arith.constant 0 : i32
    %c0_i32_1 = arith.constant 0 : i32
    return %arg0, %c0_i32, %c0_i32_0 : i32, i32, i32
  }
}

</mosaic_0001>

<llo_original>
// kernel: tpu_custom_call.1
$region0: #{tpu_custom_call.1}
  #allocation0 [shape = 'u32[]', space=smem, size = 0x4, offset = 0x4, fixed_abs, tag = 'smem constant byte address 0x4 - core index']
  #allocation1 [shape = 'u32[144,128]{1,0:T(1,128)}', space=vmem, size = 0x12000, scoped, tag = 'internal scratch']
  %s0 = inlined_call_operand.hbm [shape: f32[8,16,16], index: 0, kind: input, shape index: {}]
  %s1 = inlined_call_operand.vmem [shape: bf16[32,16], index: 1, kind: input, shape index: {}]
  %s2 = inlined_call_operand.vmem [shape: bf16[16,32], index: 2, kind: input, shape index: {}]
  %s3 = inlined_call_operand.hbm [shape: bf16[8,32,32], index: 3, kind: output, shape index: {}]
  %s4 = sld [smem:[#allocation0]]
  $region26: #{tpu_custom_call.1} parent=0
    _
  %s6 = ssub.s32 1, %s4
  %s7 = scalar_select 0, %s6, %s4
  $region1: #{tpu_custom_call.1} parent=0
    #allocation2 [shape = 'u8[65536]{0}', space=vmem, size = 0x10000, scoped, tag = 'input window, operand 0, single buffered']
    #allocation3 [shape = 's32[1]{0}', space=sflag, size = 0x4, scoped, tag = 'scoped memory for tpu_custom_call.1']
    #allocation4 [shape = 's32[1]{0}', space=sflag, size = 0x4, scoped, tag = 'scoped memory for tpu_custom_call.1']
    #allocation5 [shape = 'u8[65536]{0}', space=vmem, size = 0x10000, scoped, tag = 'output window, operand 0, single buffered']
    %8 = vsyncpa [#allocation3], 0
    %9 = vsyncpa [#allocation4], 0
    // Predicated region
    $region2: #{tpu_custom_call.1} parent=1 // pred_check
      _
    $region3: #{tpu_custom_call.1} parent=1 // pred_check_branch
      %11 = sbr.rel (0) target = $region5
    $region4: #{tpu_custom_call.1} parent=1 // pred_region
      %s13 = ssub.s32 2048, 2048
      %14 = vsyncadd [#allocation3], %s13
      %s15 = sshll.u32 [#allocation2], 4
      %s16 = int_to_ptr.vmem [resolvable:$true] %s15
      %21 = dma.hbm_to_vmem [thread:$0]  %s0, 2048, %s16, [#allocation3], 128, 128, 8
    $region5: #{tpu_custom_call.1} parent=1 // pred_fallthru
      _
    // Predicated region
    $region6: #{tpu_custom_call.1} parent=1 // pred_check
      _
    $region7: #{tpu_custom_call.1} parent=1 // pred_check_branch
      %23 = sbr.rel (0) target = $region9
    $region8: #{tpu_custom_call.1} parent=1 // pred_region
      _
    $region9: #{tpu_custom_call.1} parent=1 // pred_fallthru
      _
    // Predicated region
    $region10: #{tpu_custom_call.1} parent=1 // pred_check
      _
    $region11: #{tpu_custom_call.1} parent=1 // pred_check_branch
      %25 = sbr.rel (0) target = $region13
    $region12: #{tpu_custom_call.1} parent=1 // pred_region
      _
    $region13: #{tpu_custom_call.1} parent=1 // pred_fallthru
      _
    // Predicated region
    $region14: #{tpu_custom_call.1} parent=1 // pred_check
      _
    $region15: #{tpu_custom_call.1} parent=1 // pred_check_branch
      %27 = sbr.rel (0) target = $region17
    $region16: #{tpu_custom_call.1} parent=1 // pred_region
      %28 = dma.done [#allocation3], 2048
    $region17: #{tpu_custom_call.1} parent=1 // pred_fallthru
      _
    %v30 = vld [vmem:[#allocation2] sm:$0xff]
    %v31 = vld [vmem:[#allocation2 + $0x8] sm:$0xff]
    %v32 = vld [vmem:[#allocation2 + $0x10] sm:$0xff]
    %v33 = vld [vmem:[#allocation2 + $0x18] sm:$0xff]
    %v34 = vld [vmem:[#allocation2 + $0x20] sm:$0xff]
    %v35 = vld [vmem:[#allocation2 + $0x28] sm:$0xff]
    %v36 = vld [vmem:[#allocation2 + $0x30] sm:$0xff]
    %v37 = vld [vmem:[#allocation2 + $0x38] sm:$0xff]
    %v38 = vld [vmem:[#allocation2 + $0x40] sm:$0xff]
    %v39 = vld [vmem:[#allocation2 + $0x48] sm:$0xff]
    %v40 = vld [vmem:[#allocation2 + $0x50] sm:$0xff]
    %v41 = vld [vmem:[#allocation2 + $0x58] sm:$0xff]
    %v42 = vld [vmem:[#allocation2 + $0x60] sm:$0xff]
    %v43 = vld [vmem:[#allocation2 + $0x68] sm:$0xff]
    %v44 = vld [vmem:[#allocation2 + $0x70] sm:$0xff]
    %v45 = vld [vmem:[#allocation2 + $0x78] sm:$0xff]
    %v46 = vpack.c.bf16 %v31, %v30
    %v47 = vpack.c.bf16 %v33, %v32
    %v48 = vpack.c.bf16 %v35, %v34
    %v49 = vpack.c.bf16 %v37, %v36
    %v50 = vpack.c.bf16 %v39, %v38
    %v51 = vpack.c.bf16 %v41, %v40
    %v52 = vpack.c.bf16 %v43, %v42
    %v53 = vpack.c.bf16 %v45, %v44
    %v54 = vld [vmem:[%s2] sm:$0xf]
    %v55 = vld [vmem:[%s2 + $0x4] sm:$0xf]
    %v58 = vunpack.c.l.b16 %v54
    %v59 = vunpack.c.l.b16 %v55
    %v60 = vpack.c.b16 %v59, %v58
    %vm62 = vcmask 130048
    %v64 = vsel %vm62, %v46, 0
    %v67 = vsel %vm62, %v47, 0
    %v70 = vsel %vm62, %v48, 0
    %v73 = vsel %vm62, %v49, 0
    %v76 = vsel %vm62, %v50, 0
    %v79 = vsel %vm62, %v51, 0
    %v82 = vsel %vm62, %v52, 0
    %v85 = vsel %vm62, %v53, 0
    %87 = vmatprep.subr.bf16.mxu0 0
    %88 = vmatpush1.bf16.msra.mxu0 0
    %89 = vmatprep.subr.bf16.mxu0 0
    %90 = vmatpush1.bf16.msra.mxu0 0
    %91 = vmatprep.subr.bf16.mxu0 0
    %92 = vmatpush1.bf16.msra.mxu0 0
    %93 = vmatprep.subr.bf16.mxu0 0
    %94 = vmatpush1.bf16.msra.mxu0 0
    %95 = vmatprep.subr.bf16.mxu0 0
    %96 = vmatpush1.bf16.msra.mxu0 0
    %97 = vmatprep.subr.bf16.mxu0 0
    %98 = vmatpush1.bf16.msra.mxu0 0
    %99 = vmatprep.subr.bf16.mxu0 0
    %100 = vmatpush1.bf16.msra.mxu0 0
    %101 = vmatprep.subr.bf16.mxu0 0
    %102 = vmatpush1.bf16.msra.mxu0 %v60
    %103 = vmatprep.subr.bf16.mxu0 0
    %104 = vmatpush2.bf16.msra.mxu0 0
    %105 = vmatprep.subr.bf16.mxu0 0
    %106 = vmatpush2.bf16.msra.mxu0 0
    %107 = vmatprep.subr.bf16.mxu0 0
    %108 = vmatpush2.bf16.msra.mxu0 0
    %109 = vmatprep.subr.bf16.mxu0 0
    %110 = vmatpush2.bf16.msra.mxu0 0
    %111 = vmatprep.subr.bf16.mxu0 0
    %112 = vmatpush2.bf16.msra.mxu0 0
    %113 = vmatprep.subr.bf16.mxu0 0
    %114 = vmatpush2.bf16.msra.mxu0 0
    %115 = vmatprep.subr.bf16.mxu0 0
    %116 = vmatpush2.bf16.msra.mxu0 0
    %117 = vmatprep.subr.bf16.mxu0 0
    %118 = vmatpush2.bf16.msra.mxu0 0
    %119 = vmatprep.mubr.bf16.mxu0 0
    %120 = vmatmul.mubr.bf16.gmra.mxu0 %v64
    %v121 = vpop.f32.mrf.mxu0
    %v122 = vadd.f32 0.0, %v121
    %v123 = vpop.f32.mrf.mxu0
    %v124 = vpop.f32.mrf.mxu0
    %v125 = vadd.f32 0.0, %v124
    %v126 = vpop.f32.mrf.mxu0
    %127 = vmatprep.mubr.bf16.mxu0 0
    %128 = vmatmul.mubr.bf16.gmra.mxu0 %v67
    %v129 = vpop.f32.mrf.mxu0
    %v130 = vadd.f32 0.0, %v129
    %v131 = vpop.f32.mrf.mxu0
    %v132 = vpop.f32.mrf.mxu0
    %v133 = vadd.f32 0.0, %v132
    %v134 = vpop.f32.mrf.mxu0
    %135 = vmatprep.mubr.bf16.mxu0 0
    %136 = vmatmul.mubr.bf16.gmra.mxu0 %v70
    %v137 = vpop.f32.mrf.mxu0
    %v138 = vadd.f32 0.0, %v137
    %v139 = vpop.f32.mrf.mxu0
    %v140 = vpop.f32.mrf.mxu0
    %v141 = vadd.f32 0.0, %v140
    %v142 = vpop.f32.mrf.mxu0
    %143 = vmatprep.mubr.bf16.mxu0 0
    %144 = vmatmul.mubr.bf16.gmra.mxu0 %v73
    %v145 = vpop.f32.mrf.mxu0
    %v146 = vadd.f32 0.0, %v145
    %v147 = vpop.f32.mrf.mxu0
    %v148 = vpop.f32.mrf.mxu0
    %v149 = vadd.f32 0.0, %v148
    %v150 = vpop.f32.mrf.mxu0
    %151 = vmatprep.mubr.bf16.mxu0 0
    %152 = vmatmul.mubr.bf16.gmra.mxu0 %v76
    %v153 = vpop.f32.mrf.mxu0
    %v154 = vadd.f32 0.0, %v153
    %v155 = vpop.f32.mrf.mxu0
    %v156 = vpop.f32.mrf.mxu0
    %v157 = vadd.f32 0.0, %v156
    %v158 = vpop.f32.mrf.mxu0
    %159 = vmatprep.mubr.bf16.mxu0 0
    %160 = vmatmul.mubr.bf16.gmra.mxu0 %v79
    %v161 = vpop.f32.mrf.mxu0
    %v162 = vadd.f32 0.0, %v161
    %v163 = vpop.f32.mrf.mxu0
    %v164 = vpop.f32.mrf.mxu0
    %v165 = vadd.f32 0.0, %v164
    %v166 = vpop.f32.mrf.mxu0
    %167 = vmatprep.mubr.bf16.mxu0 0
    %168 = vmatmul.mubr.bf16.gmra.mxu0 %v82
    %v169 = vpop.f32.mrf.mxu0
    %v170 = vadd.f32 0.0, %v169
    %v171 = vpop.f32.mrf.mxu0
    %v172 = vpop.f32.mrf.mxu0
    %v173 = vadd.f32 0.0, %v172
    %v174 = vpop.f32.mrf.mxu0
    %175 = vmatprep.mubr.bf16.mxu0 0
    %176 = vmatmul.mubr.bf16.gmra.mxu0 %v85
    %v177 = vpop.f32.mrf.mxu0
    %v178 = vadd.f32 0.0, %v177
    %v179 = vpop.f32.mrf.mxu0
    %v180 = vpop.f32.mrf.mxu0
    %v181 = vadd.f32 0.0, %v180
    %v182 = vpop.f32.mrf.mxu0
    %183 = vdwg.mxu0
    %v184 = vcombine.low %v122, %v138
    %v185 = vcombine.high %v122, %v138
    %v187 = vunpack.c.l.s4 1983009808
    %v188 = vunpack.c.0.s8 %v187
    %v189 = vlaneseq
    %v190 = vshrl.u32 %v189, 7
    %v191 = vsub.s32 %v188, %v190
    %v192 = vrot.slane %v184, %v191
    %v194 = vunpack.c.l.s4 1983009808
    %v195 = vunpack.c.0.s8 %v194
    %v196 = vlaneseq
    %v197 = vshrl.u32 %v196, 7
    %v198 = vsub.s32 %v195, %v197
    %v199 = vrot.slane %v185, %v198
    %v200 = vcombine.low %v130, %v146
    %v201 = vcombine.high %v130, %v146
    %v203 = vunpack.c.l.s4 1983009808
    %v204 = vunpack.c.0.s8 %v203
    %v205 = vlaneseq
    %v206 = vshrl.u32 %v205, 7
    %v207 = vsub.s32 %v204, %v206
    %v208 = vrot.slane %v200, %v207
    %v210 = vunpack.c.l.s4 1983009808
    %v211 = vunpack.c.0.s8 %v210
    %v212 = vlaneseq
    %v213 = vshrl.u32 %v212, 7
    %v214 = vsub.s32 %v211, %v213
    %v215 = vrot.slane %v201, %v214
    %v216 = vcombine.low %v154, %v170
    %v217 = vcombine.high %v154, %v170
    %v219 = vunpack.c.l.s4 1983009808
    %v220 = vunpack.c.0.s8 %v219
    %v221 = vlaneseq
    %v222 = vshrl.u32 %v221, 7
    %v223 = vsub.s32 %v220, %v222
    %v224 = vrot.slane %v216, %v223
    %v226 = vunpack.c.l.s4 1983009808
    %v227 = vunpack.c.0.s8 %v226
    %v228 = vlaneseq
    %v229 = vshrl.u32 %v228, 7
    %v230 = vsub.s32 %v227, %v229
    %v231 = vrot.slane %v217, %v230
    %v232 = vcombine.low %v162, %v178
    %v233 = vcombine.high %v162, %v178
    %v235 = vunpack.c.l.s4 1983009808
    %v236 = vunpack.c.0.s8 %v235
    %v237 = vlaneseq
    %v238 = vshrl.u32 %v237, 7
    %v239 = vsub.s32 %v236, %v238
    %v240 = vrot.slane %v232, %v239
    %v242 = vunpack.c.l.s4 1983009808
    %v243 = vunpack.c.0.s8 %v242
    %v244 = vlaneseq
    %v245 = vshrl.u32 %v244, 7
    %v246 = vsub.s32 %v243, %v245
    %v247 = vrot.slane %v233, %v246
    %v248 = vcombine.low %v192, %v208
    %v249 = vcombine.high %v192, %v208
    %v251 = vunpack.c.l.s4 1934713408
    %v252 = vunpack.c.0.s8 %v251
    %v253 = vlaneseq
    %v254 = vshrl.u32 %v253, 7
    %v255 = vsub.s32 %v252, %v254
    %v256 = vrot.slane %v248, %v255
    %v258 = vunpack.c.l.s4 1934713408
    %v259 = vunpack.c.0.s8 %v258
    %v260 = vlaneseq
    %v261 = vshrl.u32 %v260, 7
    %v262 = vsub.s32 %v259, %v261
    %v263 = vrot.slane %v249, %v262
    %v264 = vcombine.low %v199, %v215
    %v265 = vcombine.high %v199, %v215
    %v267 = vunpack.c.l.s4 1934713408
    %v268 = vunpack.c.0.s8 %v267
    %v269 = vlaneseq
    %v270 = vshrl.u32 %v269, 7
    %v271 = vsub.s32 %v268, %v270
    %v272 = vrot.slane %v264, %v271
    %v274 = vunpack.c.l.s4 1934713408
    %v275 = vunpack.c.0.s8 %v274
    %v276 = vlaneseq
    %v277 = vshrl.u32 %v276, 7
    %v278 = vsub.s32 %v275, %v277
    %v279 = vrot.slane %v265, %v278
    %v280 = vcombine.low %v224, %v240
    %v281 = vcombine.high %v224, %v240
    %v283 = vunpack.c.l.s4 1934713408
    %v284 = vunpack.c.0.s8 %v283
    %v285 = vlaneseq
    %v286 = vshrl.u32 %v285, 7
    %v287 = vsub.s32 %v284, %v286
    %v288 = vrot.slane %v280, %v287
    %v290 = vunpack.c.l.s4 1934713408
    %v291 = vunpack.c.0.s8 %v290
    %v292 = vlaneseq
    %v293 = vshrl.u32 %v292, 7
    %v294 = vsub.s32 %v291, %v293
    %v295 = vrot.slane %v281, %v294
    %v296 = vcombine.low %v231, %v247
    %v297 = vcombine.high %v231, %v247
    %v299 = vunpack.c.l.s4 1934713408
    %v300 = vunpack.c.0.s8 %v299
    %v301 = vlaneseq
    %v302 = vshrl.u32 %v301, 7
    %v303 = vsub.s32 %v300, %v302
    %v304 = vrot.slane %v296, %v303
    %v306 = vunpack.c.l.s4 1934713408
    %v307 = vunpack.c.0.s8 %v306
    %v308 = vlaneseq
    %v309 = vshrl.u32 %v308, 7
    %v310 = vsub.s32 %v307, %v309
    %v311 = vrot.slane %v297, %v310
    %v312 = vcombine.low %v256, %v288
    %v313 = vcombine.high %v256, %v288
    %v314 = vcombine.low %v263, %v295
    %v315 = vcombine.high %v263, %v295
    %v316 = vcombine.low %v272, %v304
    %v317 = vcombine.high %v272, %v304
    %v318 = vcombine.low %v279, %v311
    %v319 = vcombine.high %v279, %v311
    %v320 = vcombine.low %v125, %v141
    %v321 = vcombine.high %v125, %v141
    %v323 = vunpack.c.l.s4 1983009808
    %v324 = vunpack.c.0.s8 %v323
    %v325 = vlaneseq
    %v326 = vshrl.u32 %v325, 7
    %v327 = vsub.s32 %v324, %v326
    %v328 = vrot.slane %v320, %v327
    %v330 = vunpack.c.l.s4 1983009808
    %v331 = vunpack.c.0.s8 %v330
    %v332 = vlaneseq
    %v333 = vshrl.u32 %v332, 7
    %v334 = vsub.s32 %v331, %v333
    %v335 = vrot.slane %v321, %v334
    %v336 = vcombine.low %v133, %v149
    %v337 = vcombine.high %v133, %v149
    %v339 = vunpack.c.l.s4 1983009808
    %v340 = vunpack.c.0.s8 %v339
    %v341 = vlaneseq
    %v342 = vshrl.u32 %v341, 7
    %v343 = vsub.s32 %v340, %v342
    %v344 = vrot.slane %v336, %v343
    %v346 = vunpack.c.l.s4 1983009808
    %v347 = vunpack.c.0.s8 %v346
    %v348 = vlaneseq
    %v349 = vshrl.u32 %v348, 7
    %v350 = vsub.s32 %v347, %v349
    %v351 = vrot.slane %v337, %v350
    %v352 = vcombine.low %v157, %v173
    %v353 = vcombine.high %v157, %v173
    %v355 = vunpack.c.l.s4 1983009808
    %v356 = vunpack.c.0.s8 %v355
    %v357 = vlaneseq
    %v358 = vshrl.u32 %v357, 7
    %v359 = vsub.s32 %v356, %v358
    %v360 = vrot.slane %v352, %v359
    %v362 = vunpack.c.l.s4 1983009808
    %v363 = vunpack.c.0.s8 %v362
    %v364 = vlaneseq
    %v365 = vshrl.u32 %v364, 7
    %v366 = vsub.s32 %v363, %v365
    %v367 = vrot.slane %v353, %v366
    %v368 = vcombine.low %v165, %v181
    %v369 = vcombine.high %v165, %v181
    %v371 = vunpack.c.l.s4 1983009808
    %v372 = vunpack.c.0.s8 %v371
    %v373 = vlaneseq
    %v374 = vshrl.u32 %v373, 7
    %v375 = vsub.s32 %v372, %v374
    %v376 = vrot.slane %v368, %v375
    %v378 = vunpack.c.l.s4 1983009808
    %v379 = vunpack.c.0.s8 %v378
    %v380 = vlaneseq
    %v381 = vshrl.u32 %v380, 7
    %v382 = vsub.s32 %v379, %v381
    %v383 = vrot.slane %v369, %v382
    %v384 = vcombine.low %v328, %v344
    %v385 = vcombine.high %v328, %v344
    %v387 = vunpack.c.l.s4 1934713408
    %v388 = vunpack.c.0.s8 %v387
    %v389 = vlaneseq
    %v390 = vshrl.u32 %v389, 7
    %v391 = vsub.s32 %v388, %v390
    %v392 = vrot.slane %v384, %v391
    %v394 = vunpack.c.l.s4 1934713408
    %v395 = vunpack.c.0.s8 %v394
    %v396 = vlaneseq
    %v397 = vshrl.u32 %v396, 7
    %v398 = vsub.s32 %v395, %v397
    %v399 = vrot.slane %v385, %v398
    %v400 = vcombine.low %v335, %v351
    %v401 = vcombine.high %v335, %v351
    %v403 = vunpack.c.l.s4 1934713408
    %v404 = vunpack.c.0.s8 %v403
    %v405 = vlaneseq
    %v406 = vshrl.u32 %v405, 7
    %v407 = vsub.s32 %v404, %v406
    %v408 = vrot.slane %v400, %v407
    %v410 = vunpack.c.l.s4 1934713408
    %v411 = vunpack.c.0.s8 %v410
    %v412 = vlaneseq
    %v413 = vshrl.u32 %v412, 7
    %v414 = vsub.s32 %v411, %v413
    %v415 = vrot.slane %v401, %v414
    %v416 = vcombine.low %v360, %v376
    %v417 = vcombine.high %v360, %v376
    %v419 = vunpack.c.l.s4 1934713408
    %v420 = vunpack.c.0.s8 %v419
    %v421 = vlaneseq
    %v422 = vshrl.u32 %v421, 7
    %v423 = vsub.s32 %v420, %v422
    %v424 = vrot.slane %v416, %v423
    %v426 = vunpack.c.l.s4 1934713408
    %v427 = vunpack.c.0.s8 %v426
    %v428 = vlaneseq
    %v429 = vshrl.u32 %v428, 7
    %v430 = vsub.s32 %v427, %v429
    %v431 = vrot.slane %v417, %v430
    %v432 = vcombine.low %v367, %v383
    %v433 = vcombine.high %v367, %v383
    %v435 = vunpack.c.l.s4 1934713408
    %v436 = vunpack.c.0.s8 %v435
    %v437 = vlaneseq
    %v438 = vshrl.u32 %v437, 7
    %v439 = vsub.s32 %v436, %v438
    %v440 = vrot.slane %v432, %v439
    %v442 = vunpack.c.l.s4 1934713408
    %v443 = vunpack.c.0.s8 %v442
    %v444 = vlaneseq
    %v445 = vshrl.u32 %v444, 7
    %v446 = vsub.s32 %v443, %v445
    %v447 = vrot.slane %v433, %v446
    %v448 = vcombine.low %v392, %v424
    %v449 = vcombine.high %v392, %v424
    %v450 = vcombine.low %v399, %v431
    %v451 = vcombine.high %v399, %v431
    %v452 = vcombine.low %v408, %v440
    %v453 = vcombine.high %v408, %v440
    %v454 = vcombine.low %v415, %v447
    %v455 = vcombine.high %v415, %v447
    %v456 = vcombine.low %v312, %v314
    %v457 = vcombine.high %v312, %v314
    %v459 = vunpack.c.l.s4 1983009808
    %v460 = vunpack.c.0.s8 %v459
    %v461 = vlaneseq
    %v462 = vshrl.u32 %v461, 7
    %v463 = vsub.s32 %v460, %v462
    %v464 = vrot.slane %v456, %v463
    %v466 = vunpack.c.l.s4 1983009808
    %v467 = vunpack.c.0.s8 %v466
    %v468 = vlaneseq
    %v469 = vshrl.u32 %v468, 7
    %v470 = vsub.s32 %v467, %v469
    %v471 = vrot.slane %v457, %v470
    %v472 = vcombine.low %v313, %v315
    %v473 = vcombine.high %v313, %v315
    %v475 = vunpack.c.l.s4 1983009808
    %v476 = vunpack.c.0.s8 %v475
    %v477 = vlaneseq
    %v478 = vshrl.u32 %v477, 7
    %v479 = vsub.s32 %v476, %v478
    %v480 = vrot.slane %v472, %v479
    %v482 = vunpack.c.l.s4 1983009808
    %v483 = vunpack.c.0.s8 %v482
    %v484 = vlaneseq
    %v485 = vshrl.u32 %v484, 7
    %v486 = vsub.s32 %v483, %v485
    %v487 = vrot.slane %v473, %v486
    %v488 = vcombine.low %v316, %v318
    %v489 = vcombine.high %v316, %v318
    %v491 = vunpack.c.l.s4 1983009808
    %v492 = vunpack.c.0.s8 %v491
    %v493 = vlaneseq
    %v494 = vshrl.u32 %v493, 7
    %v495 = vsub.s32 %v492, %v494
    %v496 = vrot.slane %v488, %v495
    %v498 = vunpack.c.l.s4 1983009808
    %v499 = vunpack.c.0.s8 %v498
    %v500 = vlaneseq
    %v501 = vshrl.u32 %v500, 7
    %v502 = vsub.s32 %v499, %v501
    %v503 = vrot.slane %v489, %v502
    %v504 = vcombine.low %v317, %v319
    %v505 = vcombine.high %v317, %v319
    %v507 = vunpack.c.l.s4 1983009808
    %v508 = vunpack.c.0.s8 %v507
    %v509 = vlaneseq
    %v510 = vshrl.u32 %v509, 7
    %v511 = vsub.s32 %v508, %v510
    %v512 = vrot.slane %v504, %v511
    %v514 = vunpack.c.l.s4 1983009808
    %v515 = vunpack.c.0.s8 %v514
    %v516 = vlaneseq
    %v517 = vshrl.u32 %v516, 7
    %v518 = vsub.s32 %v515, %v517
    %v519 = vrot.slane %v505, %v518
    %v520 = vcombine.low %v464, %v480
    %v521 = vcombine.high %v464, %v480
    %v523 = vunpack.c.l.s4 1934713408
    %v524 = vunpack.c.0.s8 %v523
    %v525 = vlaneseq
    %v526 = vshrl.u32 %v525, 7
    %v527 = vsub.s32 %v524, %v526
    %v528 = vrot.slane %v520, %v527
    %v530 = vunpack.c.l.s4 1934713408
    %v531 = vunpack.c.0.s8 %v530
    %v532 = vlaneseq
    %v533 = vshrl.u32 %v532, 7
    %v534 = vsub.s32 %v531, %v533
    %v535 = vrot.slane %v521, %v534
    %v536 = vcombine.low %v471, %v487
    %v537 = vcombine.high %v471, %v487
    %v539 = vunpack.c.l.s4 1934713408
    %v540 = vunpack.c.0.s8 %v539
    %v541 = vlaneseq
    %v542 = vshrl.u32 %v541, 7
    %v543 = vsub.s32 %v540, %v542
    %v544 = vrot.slane %v536, %v543
    %v546 = vunpack.c.l.s4 1934713408
    %v547 = vunpack.c.0.s8 %v546
    %v548 = vlaneseq
    %v549 = vshrl.u32 %v548, 7
    %v550 = vsub.s32 %v547, %v549
    %v551 = vrot.slane %v537, %v550
    %v552 = vcombine.low %v496, %v512
    %v553 = vcombine.high %v496, %v512
    %v555 = vunpack.c.l.s4 1934713408
    %v556 = vunpack.c.0.s8 %v555
    %v557 = vlaneseq
    %v558 = vshrl.u32 %v557, 7
    %v559 = vsub.s32 %v556, %v558
    %v560 = vrot.slane %v552, %v559
    %v562 = vunpack.c.l.s4 1934713408
    %v563 = vunpack.c.0.s8 %v562
    %v564 = vlaneseq
    %v565 = vshrl.u32 %v564, 7
    %v566 = vsub.s32 %v563, %v565
    %v567 = vrot.slane %v553, %v566
    %v568 = vcombine.low %v503, %v519
    %v569 = vcombine.high %v503, %v519
    %v571 = vunpack.c.l.s4 1934713408
    %v572 = vunpack.c.0.s8 %v571
    %v573 = vlaneseq
    %v574 = vshrl.u32 %v573, 7
    %v575 = vsub.s32 %v572, %v574
    %v576 = vrot.slane %v568, %v575
    %v578 = vunpack.c.l.s4 1934713408
    %v579 = vunpack.c.0.s8 %v578
    %v580 = vlaneseq
    %v581 = vshrl.u32 %v580, 7
    %v582 = vsub.s32 %v579, %v581
    %v583 = vrot.slane %v569, %v582
    %v584 = vcombine.low %v528, %v560
    %v585 = vcombine.high %v528, %v560
    %v586 = vcombine.low %v535, %v567
    %v587 = vcombine.high %v535, %v567
    %v588 = vcombine.low %v544, %v576
    %v589 = vcombine.high %v544, %v576
    %v590 = vcombine.low %v551, %v583
    %v591 = vcombine.high %v551, %v583
    %v592 = vcombine.low %v448, %v450
    %v593 = vcombine.high %v448, %v450
    %v595 = vunpack.c.l.s4 1983009808
    %v596 = vunpack.c.0.s8 %v595
    %v597 = vlaneseq
    %v598 = vshrl.u32 %v597, 7
    %v599 = vsub.s32 %v596, %v598
    %v600 = vrot.slane %v592, %v599
    %v602 = vunpack.c.l.s4 1983009808
    %v603 = vunpack.c.0.s8 %v602
    %v604 = vlaneseq
    %v605 = vshrl.u32 %v604, 7
    %v606 = vsub.s32 %v603, %v605
    %v607 = vrot.slane %v593, %v606
    %v608 = vcombine.low %v449, %v451
    %v609 = vcombine.high %v449, %v451
    %v611 = vunpack.c.l.s4 1983009808
    %v612 = vunpack.c.0.s8 %v611
    %v613 = vlaneseq
    %v614 = vshrl.u32 %v613, 7
    %v615 = vsub.s32 %v612, %v614
    %v616 = vrot.slane %v608, %v615
    %v618 = vunpack.c.l.s4 1983009808
    %v619 = vunpack.c.0.s8 %v618
    %v620 = vlaneseq
    %v621 = vshrl.u32 %v620, 7
    %v622 = vsub.s32 %v619, %v621
    %v623 = vrot.slane %v609, %v622
    %v624 = vcombine.low %v452, %v454
    %v625 = vcombine.high %v452, %v454
    %v627 = vunpack.c.l.s4 1983009808
    %v628 = vunpack.c.0.s8 %v627
    %v629 = vlaneseq
    %v630 = vshrl.u32 %v629, 7
    %v631 = vsub.s32 %v628, %v630
    %v632 = vrot.slane %v624, %v631
    %v634 = vunpack.c.l.s4 1983009808
    %v635 = vunpack.c.0.s8 %v634
    %v636 = vlaneseq
    %v637 = vshrl.u32 %v636, 7
    %v638 = vsub.s32 %v635, %v637
    %v639 = vrot.slane %v625, %v638
    %v640 = vcombine.low %v453, %v455
    %v641 = vcombine.high %v453, %v455
    %v643 = vunpack.c.l.s4 1983009808
    %v644 = vunpack.c.0.s8 %v643
    %v645 = vlaneseq
    %v646 = vshrl.u32 %v645, 7
    %v647 = vsub.s32 %v644, %v646
    %v648 = vrot.slane %v640, %v647
    %v650 = vunpack.c.l.s4 1983009808
    %v651 = vunpack.c.0.s8 %v650
    %v652 = vlaneseq
    %v653 = vshrl.u32 %v652, 7
    %v654 = vsub.s32 %v651, %v653
    %v655 = vrot.slane %v641, %v654
    %v656 = vcombine.low %v600, %v616
    %v657 = vcombine.high %v600, %v616
    %v659 = vunpack.c.l.s4 1934713408
    %v660 = vunpack.c.0.s8 %v659
    %v661 = vlaneseq
    %v662 = vshrl.u32 %v661, 7
    %v663 = vsub.s32 %v660, %v662
    %v664 = vrot.slane %v656, %v663
    %v666 = vunpack.c.l.s4 1934713408
    %v667 = vunpack.c.0.s8 %v666
    %v668 = vlaneseq
    %v669 = vshrl.u32 %v668, 7
    %v670 = vsub.s32 %v667, %v669
    %v671 = vrot.slane %v657, %v670
    %v672 = vcombine.low %v607, %v623
    %v673 = vcombine.high %v607, %v623
    %v675 = vunpack.c.l.s4 1934713408
    %v676 = vunpack.c.0.s8 %v675
    %v677 = vlaneseq
    %v678 = vshrl.u32 %v677, 7
    %v679 = vsub.s32 %v676, %v678
    %v680 = vrot.slane %v672, %v679
    %v682 = vunpack.c.l.s4 1934713408
    %v683 = vunpack.c.0.s8 %v682
    %v684 = vlaneseq
    %v685 = vshrl.u32 %v684, 7
    %v686 = vsub.s32 %v683, %v685
    %v687 = vrot.slane %v673, %v686
    %v688 = vcombine.low %v632, %v648
    %v689 = vcombine.high %v632, %v648
    %v691 = vunpack.c.l.s4 1934713408
    %v692 = vunpack.c.0.s8 %v691
    %v693 = vlaneseq
    %v694 = vshrl.u32 %v693, 7
    %v695 = vsub.s32 %v692, %v694
    %v696 = vrot.slane %v688, %v695
    %v698 = vunpack.c.l.s4 1934713408
    %v699 = vunpack.c.0.s8 %v698
    %v700 = vlaneseq
    %v701 = vshrl.u32 %v700, 7
    %v702 = vsub.s32 %v699, %v701
    %v703 = vrot.slane %v689, %v702
    %v704 = vcombine.low %v639, %v655
    %v705 = vcombine.high %v639, %v655
    %v707 = vunpack.c.l.s4 1934713408
    %v708 = vunpack.c.0.s8 %v707
    %v709 = vlaneseq
    %v710 = vshrl.u32 %v709, 7
    %v711 = vsub.s32 %v708, %v710
    %v712 = vrot.slane %v704, %v711
    %v714 = vunpack.c.l.s4 1934713408
    %v715 = vunpack.c.0.s8 %v714
    %v716 = vlaneseq
    %v717 = vshrl.u32 %v716, 7
    %v718 = vsub.s32 %v715, %v717
    %v719 = vrot.slane %v705, %v718
    %v720 = vcombine.low %v664, %v696
    %v721 = vcombine.high %v664, %v696
    %v722 = vcombine.low %v671, %v703
    %v723 = vcombine.high %v671, %v703
    %v724 = vcombine.low %v680, %v712
    %v725 = vcombine.high %v680, %v712
    %v726 = vcombine.low %v687, %v719
    %v727 = vcombine.high %v687, %v719
    %730 = vrot.lane.b32.xlu0 %v585, 32
    %v731 = vpop.permute.xlu0 %730
    %732 = vrot.lane.b32.xlu0 %v721, 32
    %v733 = vpop.permute.xlu0 %732
    %738 = vrot.lane.b32.xlu0 %v586, 64
    %v739 = vpop.permute.xlu0 %738
    %740 = vrot.lane.b32.xlu0 %v722, 64
    %v741 = vpop.permute.xlu0 %740
    %746 = vrot.lane.b32.xlu0 %v587, 96
    %v747 = vpop.permute.xlu0 %746
    %748 = vrot.lane.b32.xlu0 %v723, 96
    %v749 = vpop.permute.xlu0 %748
    %754 = vrot.lane.b32.xlu0 %v589, 32
    %v755 = vpop.permute.xlu0 %754
    %756 = vrot.lane.b32.xlu0 %v725, 32
    %v757 = vpop.permute.xlu0 %756
    %762 = vrot.lane.b32.xlu0 %v590, 64
    %v763 = vpop.permute.xlu0 %762
    %764 = vrot.lane.b32.xlu0 %v726, 64
    %v765 = vpop.permute.xlu0 %764
    %770 = vrot.lane.b32.xlu0 %v591, 96
    %v771 = vpop.permute.xlu0 %770
    %772 = vrot.lane.b32.xlu0 %v727, 96
    %v773 = vpop.permute.xlu0 %772
    %vm776 = vcmask 261120
    %v777 = vsel %vm776, %v584, %v731
    %v778 = vsel %vm776, %v720, %v733
    %vm779 = vcmask 523264
    %v780 = vsel %vm779, %v777, %v739
    %v781 = vsel %vm779, %v778, %v741
    %vm782 = vcmask 785408
    %v783 = vsel %vm782, %v780, %v747
    %v784 = vsel %vm782, %v781, %v749
    %v785 = vsel %vm776, %v588, %v755
    %v786 = vsel %vm776, %v724, %v757
    %v787 = vsel %vm779, %v785, %v763
    %v788 = vsel %vm779, %v786, %v765
    %v789 = vsel %vm782, %v787, %v771
    %v790 = vsel %vm782, %v788, %v773
    %v791 = vld [vmem:[%s1] sm:$0xf]
    %v792 = vld [vmem:[%s1 + $0x4] sm:$0xf]
    %v793 = vld [vmem:[%s1 + $0x8] sm:$0xf]
    %v794 = vld [vmem:[%s1 + $0xc] sm:$0xf]
    %v795 = vpack.c.bf16 %v784, %v783
    %v796 = vpack.c.bf16 %v790, %v789
    %v801 = vunpack.c.l.b16 %v791
    %v802 = vunpack.c.l.b16 %v792
    %v803 = vunpack.c.l.b16 %v793
    %v804 = vunpack.c.l.b16 %v794
    %v805 = vpack.c.b16 %v802, %v801
    %v806 = vpack.c.b16 %v804, %v803
    %v808 = vsel %vm62, %v805, 0
    %v811 = vsel %vm62, %v806, 0
    %813 = vmatprep.subr.bf16.mxu0 0
    %814 = vmatpush1.bf16.msra.mxu0 0
    %815 = vmatprep.subr.bf16.mxu0 0
    %816 = vmatpush1.bf16.msra.mxu0 0
    %817 = vmatprep.subr.bf16.mxu0 0
    %818 = vmatpush1.bf16.msra.mxu0 0
    %819 = vmatprep.subr.bf16.mxu0 0
    %820 = vmatpush1.bf16.msra.mxu0 0
    %821 = vmatprep.subr.bf16.mxu0 0
    %822 = vmatpush1.bf16.msra.mxu0 0
    %823 = vmatprep.subr.bf16.mxu0 0
    %824 = vmatpush1.bf16.msra.mxu0 0
    %825 = vmatprep.subr.bf16.mxu0 0
    %826 = vmatpush1.bf16.msra.mxu0 0
    %827 = vmatprep.subr.bf16.mxu0 %v796
    %828 = vmatpush1.bf16.msra.mxu0 %v795
    %829 = vmatprep.subr.bf16.mxu0 0
    %830 = vmatpush2.bf16.msra.mxu0 0
    %831 = vmatprep.subr.bf16.mxu0 0
    %832 = vmatpush2.bf16.msra.mxu0 0
    %833 = vmatprep.subr.bf16.mxu0 0
    %834 = vmatpush2.bf16.msra.mxu0 0
    %835 = vmatprep.subr.bf16.mxu0 0
    %836 = vmatpush2.bf16.msra.mxu0 0
    %837 = vmatprep.subr.bf16.mxu0 0
    %838 = vmatpush2.bf16.msra.mxu0 0
    %839 = vmatprep.subr.bf16.mxu0 0
    %840 = vmatpush2.bf16.msra.mxu0 0
    %841 = vmatprep.subr.bf16.mxu0 0
    %842 = vmatpush2.bf16.msra.mxu0 0
    %843 = vmatprep.subr.bf16.mxu0 0
    %844 = vmatpush2.bf16.msra.mxu0 0
    %845 = vmatprep.mubr.bf16.mxu0 0
    %846 = vmatmul.mubr.bf16.gmra.mxu0 %v808
    %v847 = vpop.f32.mrf.mxu0
    %v848 = vadd.f32 0.0, %v847
    %v849 = vpop.f32.mrf.mxu0
    %v850 = vadd.f32 0.0, %v849
    %v851 = vpop.f32.mrf.mxu0
    %v852 = vadd.f32 0.0, %v851
    %v853 = vpop.f32.mrf.mxu0
    %v854 = vadd.f32 0.0, %v853
    %855 = vmatprep.mubr.bf16.mxu0 0
    %856 = vmatmul.mubr.bf16.gmra.mxu0 %v811
    %v857 = vpop.f32.mrf.mxu0
    %v858 = vadd.f32 0.0, %v857
    %v859 = vpop.f32.mrf.mxu0
    %v860 = vadd.f32 0.0, %v859
    %v861 = vpop.f32.mrf.mxu0
    %v862 = vadd.f32 0.0, %v861
    %v863 = vpop.f32.mrf.mxu0
    %v864 = vadd.f32 0.0, %v863
    %865 = vdwg.mxu0
    %870 = vrot.lane.b32.xlu0 %v848, 96
    %v871 = vpop.permute.xlu0 %870
    %872 = vrot.lane.b32.xlu0 %v852, 96
    %v873 = vpop.permute.xlu0 %872
    %874 = vrot.lane.b32.xlu0 %v858, 96
    %v875 = vpop.permute.xlu0 %874
    %876 = vrot.lane.b32.xlu0 %v862, 96
    %v877 = vpop.permute.xlu0 %876
    %882 = vrot.lane.b32.xlu0 %v848, 64
    %v883 = vpop.permute.xlu0 %882
    %884 = vrot.lane.b32.xlu0 %v852, 64
    %v885 = vpop.permute.xlu0 %884
    %886 = vrot.lane.b32.xlu0 %v858, 64
    %v887 = vpop.permute.xlu0 %886
    %888 = vrot.lane.b32.xlu0 %v862, 64
    %v889 = vpop.permute.xlu0 %888
    %894 = vrot.lane.b32.xlu0 %v848, 32
    %v895 = vpop.permute.xlu0 %894
    %896 = vrot.lane.b32.xlu0 %v852, 32
    %v897 = vpop.permute.xlu0 %896
    %898 = vrot.lane.b32.xlu0 %v858, 32
    %v899 = vpop.permute.xlu0 %898
    %900 = vrot.lane.b32.xlu0 %v862, 32
    %v901 = vpop.permute.xlu0 %900
    %910 = vrot.lane.b32.xlu0 %v850, 96
    %v911 = vpop.permute.xlu0 %910
    %912 = vrot.lane.b32.xlu0 %v854, 96
    %v913 = vpop.permute.xlu0 %912
    %914 = vrot.lane.b32.xlu0 %v860, 96
    %v915 = vpop.permute.xlu0 %914
    %916 = vrot.lane.b32.xlu0 %v864, 96
    %v917 = vpop.permute.xlu0 %916
    %922 = vrot.lane.b32.xlu0 %v850, 64
    %v923 = vpop.permute.xlu0 %922
    %924 = vrot.lane.b32.xlu0 %v854, 64
    %v925 = vpop.permute.xlu0 %924
    %926 = vrot.lane.b32.xlu0 %v860, 64
    %v927 = vpop.permute.xlu0 %926
    %928 = vrot.lane.b32.xlu0 %v864, 64
    %v929 = vpop.permute.xlu0 %928
    %934 = vrot.lane.b32.xlu0 %v850, 32
    %v935 = vpop.permute.xlu0 %934
    %936 = vrot.lane.b32.xlu0 %v854, 32
    %v937 = vpop.permute.xlu0 %936
    %938 = vrot.lane.b32.xlu0 %v860, 32
    %v939 = vpop.permute.xlu0 %938
    %940 = vrot.lane.b32.xlu0 %v864, 32
    %v941 = vpop.permute.xlu0 %940
    %v946 = vcombine.low %v848, %v883
    %v947 = vcombine.high %v848, %v883
    %v949 = vunpack.c.l.s4 1983009808
    %v950 = vunpack.c.0.s8 %v949
    %v951 = vlaneseq
    %v952 = vshrl.u32 %v951, 7
    %v953 = vsub.s32 %v950, %v952
    %v954 = vrot.slane %v946, %v953
    %v956 = vunpack.c.l.s4 1983009808
    %v957 = vunpack.c.0.s8 %v956
    %v958 = vlaneseq
    %v959 = vshrl.u32 %v958, 7
    %v960 = vsub.s32 %v957, %v959
    %v961 = vrot.slane %v947, %v960
    %v962 = vcombine.low %v871, %v895
    %v963 = vcombine.high %v871, %v895
    %v965 = vunpack.c.l.s4 1983009808
    %v966 = vunpack.c.0.s8 %v965
    %v967 = vlaneseq
    %v968 = vshrl.u32 %v967, 7
    %v969 = vsub.s32 %v966, %v968
    %v970 = vrot.slane %v962, %v969
    %v972 = vunpack.c.l.s4 1983009808
    %v973 = vunpack.c.0.s8 %v972
    %v974 = vlaneseq
    %v975 = vshrl.u32 %v974, 7
    %v976 = vsub.s32 %v973, %v975
    %v977 = vrot.slane %v963, %v976
    %v978 = vcombine.low %v850, %v923
    %v979 = vcombine.high %v850, %v923
    %v981 = vunpack.c.l.s4 1983009808
    %v982 = vunpack.c.0.s8 %v981
    %v983 = vlaneseq
    %v984 = vshrl.u32 %v983, 7
    %v985 = vsub.s32 %v982, %v984
    %v986 = vrot.slane %v978, %v985
    %v988 = vunpack.c.l.s4 1983009808
    %v989 = vunpack.c.0.s8 %v988
    %v990 = vlaneseq
    %v991 = vshrl.u32 %v990, 7
    %v992 = vsub.s32 %v989, %v991
    %v993 = vrot.slane %v979, %v992
    %v994 = vcombine.low %v911, %v935
    %v995 = vcombine.high %v911, %v935
    %v997 = vunpack.c.l.s4 1983009808
    %v998 = vunpack.c.0.s8 %v997
    %v999 = vlaneseq
    %v1000 = vshrl.u32 %v999, 7
    %v1001 = vsub.s32 %v998, %v1000
    %v1002 = vrot.slane %v994, %v1001
    %v1004 = vunpack.c.l.s4 1983009808
    %v1005 = vunpack.c.0.s8 %v1004
    %v1006 = vlaneseq
    %v1007 = vshrl.u32 %v1006, 7
    %v1008 = vsub.s32 %v1005, %v1007
    %v1009 = vrot.slane %v995, %v1008
    %v1010 = vcombine.low %v954, %v970
    %v1011 = vcombine.high %v954, %v970
    %v1013 = vunpack.c.l.s4 1934713408
    %v1014 = vunpack.c.0.s8 %v1013
    %v1015 = vlaneseq
    %v1016 = vshrl.u32 %v1015, 7
    %v1017 = vsub.s32 %v1014, %v1016
    %v1018 = vrot.slane %v1010, %v1017
    %v1020 = vunpack.c.l.s4 1934713408
    %v1021 = vunpack.c.0.s8 %v1020
    %v1022 = vlaneseq
    %v1023 = vshrl.u32 %v1022, 7
    %v1024 = vsub.s32 %v1021, %v1023
    %v1025 = vrot.slane %v1011, %v1024
    %v1026 = vcombine.low %v961, %v977
    %v1027 = vcombine.high %v961, %v977
    %v1029 = vunpack.c.l.s4 1934713408
    %v1030 = vunpack.c.0.s8 %v1029
    %v1031 = vlaneseq
    %v1032 = vshrl.u32 %v1031, 7
    %v1033 = vsub.s32 %v1030, %v1032
    %v1034 = vrot.slane %v1026, %v1033
    %v1036 = vunpack.c.l.s4 1934713408
    %v1037 = vunpack.c.0.s8 %v1036
    %v1038 = vlaneseq
    %v1039 = vshrl.u32 %v1038, 7
    %v1040 = vsub.s32 %v1037, %v1039
    %v1041 = vrot.slane %v1027, %v1040
    %v1042 = vcombine.low %v986, %v1002
    %v1043 = vcombine.high %v986, %v1002
    %v1045 = vunpack.c.l.s4 1934713408
    %v1046 = vunpack.c.0.s8 %v1045
    %v1047 = vlaneseq
    %v1048 = vshrl.u32 %v1047, 7
    %v1049 = vsub.s32 %v1046, %v1048
    %v1050 = vrot.slane %v1042, %v1049
    %v1052 = vunpack.c.l.s4 1934713408
    %v1053 = vunpack.c.0.s8 %v1052
    %v1054 = vlaneseq
    %v1055 = vshrl.u32 %v1054, 7
    %v1056 = vsub.s32 %v1053, %v1055
    %v1057 = vrot.slane %v1043, %v1056
    %v1058 = vcombine.low %v993, %v1009
    %v1059 = vcombine.high %v993, %v1009
    %v1061 = vunpack.c.l.s4 1934713408
    %v1062 = vunpack.c.0.s8 %v1061
    %v1063 = vlaneseq
    %v1064 = vshrl.u32 %v1063, 7
    %v1065 = vsub.s32 %v1062, %v1064
    %v1066 = vrot.slane %v1058, %v1065
    %v1068 = vunpack.c.l.s4 1934713408
    %v1069 = vunpack.c.0.s8 %v1068
    %v1070 = vlaneseq
    %v1071 = vshrl.u32 %v1070, 7
    %v1072 = vsub.s32 %v1069, %v1071
    %v1073 = vrot.slane %v1059, %v1072
    %v1074 = vcombine.low %v1018, %v1050
    %v1075 = vcombine.high %v1018, %v1050
    %v1076 = vcombine.low %v1025, %v1057
    %v1077 = vcombine.high %v1025, %v1057
    %v1078 = vcombine.low %v1034, %v1066
    %v1079 = vcombine.high %v1034, %v1066
    %v1080 = vcombine.low %v1041, %v1073
    %v1081 = vcombine.high %v1041, %v1073
    %v1082 = vcombine.low %v852, %v885
    %v1083 = vcombine.high %v852, %v885
    %v1085 = vunpack.c.l.s4 1983009808
    %v1086 = vunpack.c.0.s8 %v1085
    %v1087 = vlaneseq
    %v1088 = vshrl.u32 %v1087, 7
    %v1089 = vsub.s32 %v1086, %v1088
    %v1090 = vrot.slane %v1082, %v1089
    %v1092 = vunpack.c.l.s4 1983009808
    %v1093 = vunpack.c.0.s8 %v1092
    %v1094 = vlaneseq
    %v1095 = vshrl.u32 %v1094, 7
    %v1096 = vsub.s32 %v1093, %v1095
    %v1097 = vrot.slane %v1083, %v1096
    %v1098 = vcombine.low %v873, %v897
    %v1099 = vcombine.high %v873, %v897
    %v1101 = vunpack.c.l.s4 1983009808
    %v1102 = vunpack.c.0.s8 %v1101
    %v1103 = vlaneseq
    %v1104 = vshrl.u32 %v1103, 7
    %v1105 = vsub.s32 %v1102, %v1104
    %v1106 = vrot.slane %v1098, %v1105
    %v1108 = vunpack.c.l.s4 1983009808
    %v1109 = vunpack.c.0.s8 %v1108
    %v1110 = vlaneseq
    %v1111 = vshrl.u32 %v1110, 7
    %v1112 = vsub.s32 %v1109, %v1111
    %v1113 = vrot.slane %v1099, %v1112
    %v1114 = vcombine.low %v854, %v925
    %v1115 = vcombine.high %v854, %v925
    %v1117 = vunpack.c.l.s4 1983009808
    %v1118 = vunpack.c.0.s8 %v1117
    %v1119 = vlaneseq
    %v1120 = vshrl.u32 %v1119, 7
    %v1121 = vsub.s32 %v1118, %v1120
    %v1122 = vrot.slane %v1114, %v1121
    %v1124 = vunpack.c.l.s4 1983009808
    %v1125 = vunpack.c.0.s8 %v1124
    %v1126 = vlaneseq
    %v1127 = vshrl.u32 %v1126, 7
    %v1128 = vsub.s32 %v1125, %v1127
    %v1129 = vrot.slane %v1115, %v1128
    %v1130 = vcombine.low %v913, %v937
    %v1131 = vcombine.high %v913, %v937
    %v1133 = vunpack.c.l.s4 1983009808
    %v1134 = vunpack.c.0.s8 %v1133
    %v1135 = vlaneseq
    %v1136 = vshrl.u32 %v1135, 7
    %v1137 = vsub.s32 %v1134, %v1136
    %v1138 = vrot.slane %v1130, %v1137
    %v1140 = vunpack.c.l.s4 1983009808
    %v1141 = vunpack.c.0.s8 %v1140
    %v1142 = vlaneseq
    %v1143 = vshrl.u32 %v1142, 7
    %v1144 = vsub.s32 %v1141, %v1143
    %v1145 = vrot.slane %v1131, %v1144
    %v1146 = vcombine.low %v1090, %v1106
    %v1147 = vcombine.high %v1090, %v1106
    %v1149 = vunpack.c.l.s4 1934713408
    %v1150 = vunpack.c.0.s8 %v1149
    %v1151 = vlaneseq
    %v1152 = vshrl.u32 %v1151, 7
    %v1153 = vsub.s32 %v1150, %v1152
    %v1154 = vrot.slane %v1146, %v1153
    %v1156 = vunpack.c.l.s4 1934713408
    %v1157 = vunpack.c.0.s8 %v1156
    %v1158 = vlaneseq
    %v1159 = vshrl.u32 %v1158, 7
    %v1160 = vsub.s32 %v1157, %v1159
    %v1161 = vrot.slane %v1147, %v1160
    %v1162 = vcombine.low %v1097, %v1113
    %v1163 = vcombine.high %v1097, %v1113
    %v1165 = vunpack.c.l.s4 1934713408
    %v1166 = vunpack.c.0.s8 %v1165
    %v1167 = vlaneseq
    %v1168 = vshrl.u32 %v1167, 7
    %v1169 = vsub.s32 %v1166, %v1168
    %v1170 = vrot.slane %v1162, %v1169
    %v1172 = vunpack.c.l.s4 1934713408
    %v1173 = vunpack.c.0.s8 %v1172
    %v1174 = vlaneseq
    %v1175 = vshrl.u32 %v1174, 7
    %v1176 = vsub.s32 %v1173, %v1175
    %v1177 = vrot.slane %v1163, %v1176
    %v1178 = vcombine.low %v1122, %v1138
    %v1179 = vcombine.high %v1122, %v1138
    %v1181 = vunpack.c.l.s4 1934713408
    %v1182 = vunpack.c.0.s8 %v1181
    %v1183 = vlaneseq
    %v1184 = vshrl.u32 %v1183, 7
    %v1185 = vsub.s32 %v1182, %v1184
    %v1186 = vrot.slane %v1178, %v1185
    %v1188 = vunpack.c.l.s4 1934713408
    %v1189 = vunpack.c.0.s8 %v1188
    %v1190 = vlaneseq
    %v1191 = vshrl.u32 %v1190, 7
    %v1192 = vsub.s32 %v1189, %v1191
    %v1193 = vrot.slane %v1179, %v1192
    %v1194 = vcombine.low %v1129, %v1145
    %v1195 = vcombine.high %v1129, %v1145
    %v1197 = vunpack.c.l.s4 1934713408
    %v1198 = vunpack.c.0.s8 %v1197
    %v1199 = vlaneseq
    %v1200 = vshrl.u32 %v1199, 7
    %v1201 = vsub.s32 %v1198, %v1200
    %v1202 = vrot.slane %v1194, %v1201
    %v1204 = vunpack.c.l.s4 1934713408
    %v1205 = vunpack.c.0.s8 %v1204
    %v1206 = vlaneseq
    %v1207 = vshrl.u32 %v1206, 7
    %v1208 = vsub.s32 %v1205, %v1207
    %v1209 = vrot.slane %v1195, %v1208
    %v1210 = vcombine.low %v1154, %v1186
    %v1211 = vcombine.high %v1154, %v1186
    %v1212 = vcombine.low %v1161, %v1193
    %v1213 = vcombine.high %v1161, %v1193
    %v1214 = vcombine.low %v1170, %v1202
    %v1215 = vcombine.high %v1170, %v1202
    %v1216 = vcombine.low %v1177, %v1209
    %v1217 = vcombine.high %v1177, %v1209
    %v1218 = vcombine.low %v858, %v887
    %v1219 = vcombine.high %v858, %v887
    %v1221 = vunpack.c.l.s4 1983009808
    %v1222 = vunpack.c.0.s8 %v1221
    %v1223 = vlaneseq
    %v1224 = vshrl.u32 %v1223, 7
    %v1225 = vsub.s32 %v1222, %v1224
    %v1226 = vrot.slane %v1218, %v1225
    %v1228 = vunpack.c.l.s4 1983009808
    %v1229 = vunpack.c.0.s8 %v1228
    %v1230 = vlaneseq
    %v1231 = vshrl.u32 %v1230, 7
    %v1232 = vsub.s32 %v1229, %v1231
    %v1233 = vrot.slane %v1219, %v1232
    %v1234 = vcombine.low %v875, %v899
    %v1235 = vcombine.high %v875, %v899
    %v1237 = vunpack.c.l.s4 1983009808
    %v1238 = vunpack.c.0.s8 %v1237
    %v1239 = vlaneseq
    %v1240 = vshrl.u32 %v1239, 7
    %v1241 = vsub.s32 %v1238, %v1240
    %v1242 = vrot.slane %v1234, %v1241
    %v1244 = vunpack.c.l.s4 1983009808
    %v1245 = vunpack.c.0.s8 %v1244
    %v1246 = vlaneseq
    %v1247 = vshrl.u32 %v1246, 7
    %v1248 = vsub.s32 %v1245, %v1247
    %v1249 = vrot.slane %v1235, %v1248
    %v1250 = vcombine.low %v860, %v927
    %v1251 = vcombine.high %v860, %v927
    %v1253 = vunpack.c.l.s4 1983009808
    %v1254 = vunpack.c.0.s8 %v1253
    %v1255 = vlaneseq
    %v1256 = vshrl.u32 %v1255, 7
    %v1257 = vsub.s32 %v1254, %v1256
    %v1258 = vrot.slane %v1250, %v1257
    %v1260 = vunpack.c.l.s4 1983009808
    %v1261 = vunpack.c.0.s8 %v1260
    %v1262 = vlaneseq
    %v1263 = vshrl.u32 %v1262, 7
    %v1264 = vsub.s32 %v1261, %v1263
    %v1265 = vrot.slane %v1251, %v1264
    %v1266 = vcombine.low %v915, %v939
    %v1267 = vcombine.high %v915, %v939
    %v1269 = vunpack.c.l.s4 1983009808
    %v1270 = vunpack.c.0.s8 %v1269
    %v1271 = vlaneseq
    %v1272 = vshrl.u32 %v1271, 7
    %v1273 = vsub.s32 %v1270, %v1272
    %v1274 = vrot.slane %v1266, %v1273
    %v1276 = vunpack.c.l.s4 1983009808
    %v1277 = vunpack.c.0.s8 %v1276
    %v1278 = vlaneseq
    %v1279 = vshrl.u32 %v1278, 7
    %v1280 = vsub.s32 %v1277, %v1279
    %v1281 = vrot.slane %v1267, %v1280
    %v1282 = vcombine.low %v1226, %v1242
    %v1283 = vcombine.high %v1226, %v1242
    %v1285 = vunpack.c.l.s4 1934713408
    %v1286 = vunpack.c.0.s8 %v1285
    %v1287 = vlaneseq
    %v1288 = vshrl.u32 %v1287, 7
    %v1289 = vsub.s32 %v1286, %v1288
    %v1290 = vrot.slane %v1282, %v1289
    %v1292 = vunpack.c.l.s4 1934713408
    %v1293 = vunpack.c.0.s8 %v1292
    %v1294 = vlaneseq
    %v1295 = vshrl.u32 %v1294, 7
    %v1296 = vsub.s32 %v1293, %v1295
    %v1297 = vrot.slane %v1283, %v1296
    %v1298 = vcombine.low %v1233, %v1249
    %v1299 = vcombine.high %v1233, %v1249
    %v1301 = vunpack.c.l.s4 1934713408
    %v1302 = vunpack.c.0.s8 %v1301
    %v1303 = vlaneseq
    %v1304 = vshrl.u32 %v1303, 7
    %v1305 = vsub.s32 %v1302, %v1304
    %v1306 = vrot.slane %v1298, %v1305
    %v1308 = vunpack.c.l.s4 1934713408
    %v1309 = vunpack.c.0.s8 %v1308
    %v1310 = vlaneseq
    %v1311 = vshrl.u32 %v1310, 7
    %v1312 = vsub.s32 %v1309, %v1311
    %v1313 = vrot.slane %v1299, %v1312
    %v1314 = vcombine.low %v1258, %v1274
    %v1315 = vcombine.high %v1258, %v1274
    %v1317 = vunpack.c.l.s4 1934713408
    %v1318 = vunpack.c.0.s8 %v1317
    %v1319 = vlaneseq
    %v1320 = vshrl.u32 %v1319, 7
    %v1321 = vsub.s32 %v1318, %v1320
    %v1322 = vrot.slane %v1314, %v1321
    %v1324 = vunpack.c.l.s4 1934713408
    %v1325 = vunpack.c.0.s8 %v1324
    %v1326 = vlaneseq
    %v1327 = vshrl.u32 %v1326, 7
    %v1328 = vsub.s32 %v1325, %v1327
    %v1329 = vrot.slane %v1315, %v1328
    %v1330 = vcombine.low %v1265, %v1281
    %v1331 = vcombine.high %v1265, %v1281
    %v1333 = vunpack.c.l.s4 1934713408
    %v1334 = vunpack.c.0.s8 %v1333
    %v1335 = vlaneseq
    %v1336 = vshrl.u32 %v1335, 7
    %v1337 = vsub.s32 %v1334, %v1336
    %v1338 = vrot.slane %v1330, %v1337
    %v1340 = vunpack.c.l.s4 1934713408
    %v1341 = vunpack.c.0.s8 %v1340
    %v1342 = vlaneseq
    %v1343 = vshrl.u32 %v1342, 7
    %v1344 = vsub.s32 %v1341, %v1343
    %v1345 = vrot.slane %v1331, %v1344
    %v1346 = vcombine.low %v1290, %v1322
    %v1347 = vcombine.high %v1290, %v1322
    %v1348 = vcombine.low %v1297, %v1329
    %v1349 = vcombine.high %v1297, %v1329
    %v1350 = vcombine.low %v1306, %v1338
    %v1351 = vcombine.high %v1306, %v1338
    %v1352 = vcombine.low %v1313, %v1345
    %v1353 = vcombine.high %v1313, %v1345
    %v1354 = vcombine.low %v862, %v889
    %v1355 = vcombine.high %v862, %v889
    %v1357 = vunpack.c.l.s4 1983009808
    %v1358 = vunpack.c.0.s8 %v1357
    %v1359 = vlaneseq
    %v1360 = vshrl.u32 %v1359, 7
    %v1361 = vsub.s32 %v1358, %v1360
    %v1362 = vrot.slane %v1354, %v1361
    %v1364 = vunpack.c.l.s4 1983009808
    %v1365 = vunpack.c.0.s8 %v1364
    %v1366 = vlaneseq
    %v1367 = vshrl.u32 %v1366, 7
    %v1368 = vsub.s32 %v1365, %v1367
    %v1369 = vrot.slane %v1355, %v1368
    %v1370 = vcombine.low %v877, %v901
    %v1371 = vcombine.high %v877, %v901
    %v1373 = vunpack.c.l.s4 1983009808
    %v1374 = vunpack.c.0.s8 %v1373
    %v1375 = vlaneseq
    %v1376 = vshrl.u32 %v1375, 7
    %v1377 = vsub.s32 %v1374, %v1376
    %v1378 = vrot.slane %v1370, %v1377
    %v1380 = vunpack.c.l.s4 1983009808
    %v1381 = vunpack.c.0.s8 %v1380
    %v1382 = vlaneseq
    %v1383 = vshrl.u32 %v1382, 7
    %v1384 = vsub.s32 %v1381, %v1383
    %v1385 = vrot.slane %v1371, %v1384
    %v1386 = vcombine.low %v864, %v929
    %v1387 = vcombine.high %v864, %v929
    %v1389 = vunpack.c.l.s4 1983009808
    %v1390 = vunpack.c.0.s8 %v1389
    %v1391 = vlaneseq
    %v1392 = vshrl.u32 %v1391, 7
    %v1393 = vsub.s32 %v1390, %v1392
    %v1394 = vrot.slane %v1386, %v1393
    %v1396 = vunpack.c.l.s4 1983009808
    %v1397 = vunpack.c.0.s8 %v1396
    %v1398 = vlaneseq
    %v1399 = vshrl.u32 %v1398, 7
    %v1400 = vsub.s32 %v1397, %v1399
    %v1401 = vrot.slane %v1387, %v1400
    %v1402 = vcombine.low %v917, %v941
    %v1403 = vcombine.high %v917, %v941
    %v1405 = vunpack.c.l.s4 1983009808
    %v1406 = vunpack.c.0.s8 %v1405
    %v1407 = vlaneseq
    %v1408 = vshrl.u32 %v1407, 7
    %v1409 = vsub.s32 %v1406, %v1408
    %v1410 = vrot.slane %v1402, %v1409
    %v1412 = vunpack.c.l.s4 1983009808
    %v1413 = vunpack.c.0.s8 %v1412
    %v1414 = vlaneseq
    %v1415 = vshrl.u32 %v1414, 7
    %v1416 = vsub.s32 %v1413, %v1415
    %v1417 = vrot.slane %v1403, %v1416
    %v1418 = vcombine.low %v1362, %v1378
    %v1419 = vcombine.high %v1362, %v1378
    %v1421 = vunpack.c.l.s4 1934713408
    %v1422 = vunpack.c.0.s8 %v1421
    %v1423 = vlaneseq
    %v1424 = vshrl.u32 %v1423, 7
    %v1425 = vsub.s32 %v1422, %v1424
    %v1426 = vrot.slane %v1418, %v1425
    %v1428 = vunpack.c.l.s4 1934713408
    %v1429 = vunpack.c.0.s8 %v1428
    %v1430 = vlaneseq
    %v1431 = vshrl.u32 %v1430, 7
    %v1432 = vsub.s32 %v1429, %v1431
    %v1433 = vrot.slane %v1419, %v1432
    %v1434 = vcombine.low %v1369, %v1385
    %v1435 = vcombine.high %v1369, %v1385
    %v1437 = vunpack.c.l.s4 1934713408
    %v1438 = vunpack.c.0.s8 %v1437
    %v1439 = vlaneseq
    %v1440 = vshrl.u32 %v1439, 7
    %v1441 = vsub.s32 %v1438, %v1440
    %v1442 = vrot.slane %v1434, %v1441
    %v1444 = vunpack.c.l.s4 1934713408
    %v1445 = vunpack.c.0.s8 %v1444
    %v1446 = vlaneseq
    %v1447 = vshrl.u32 %v1446, 7
    %v1448 = vsub.s32 %v1445, %v1447
    %v1449 = vrot.slane %v1435, %v1448
    %v1450 = vcombine.low %v1394, %v1410
    %v1451 = vcombine.high %v1394, %v1410
    %v1453 = vunpack.c.l.s4 1934713408
    %v1454 = vunpack.c.0.s8 %v1453
    %v1455 = vlaneseq
    %v1456 = vshrl.u32 %v1455, 7
    %v1457 = vsub.s32 %v1454, %v1456
    %v1458 = vrot.slane %v1450, %v1457
    %v1460 = vunpack.c.l.s4 1934713408
    %v1461 = vunpack.c.0.s8 %v1460
    %v1462 = vlaneseq
    %v1463 = vshrl.u32 %v1462, 7
    %v1464 = vsub.s32 %v1461, %v1463
    %v1465 = vrot.slane %v1451, %v1464
    %v1466 = vcombine.low %v1401, %v1417
    %v1467 = vcombine.high %v1401, %v1417
    %v1469 = vunpack.c.l.s4 1934713408
    %v1470 = vunpack.c.0.s8 %v1469
    %v1471 = vlaneseq
    %v1472 = vshrl.u32 %v1471, 7
    %v1473 = vsub.s32 %v1470, %v1472
    %v1474 = vrot.slane %v1466, %v1473
    %v1476 = vunpack.c.l.s4 1934713408
    %v1477 = vunpack.c.0.s8 %v1476
    %v1478 = vlaneseq
    %v1479 = vshrl.u32 %v1478, 7
    %v1480 = vsub.s32 %v1477, %v1479
    %v1481 = vrot.slane %v1467, %v1480
    %v1482 = vcombine.low %v1426, %v1458
    %v1483 = vcombine.high %v1426, %v1458
    %v1484 = vcombine.low %v1433, %v1465
    %v1485 = vcombine.high %v1433, %v1465
    %v1486 = vcombine.low %v1442, %v1474
    %v1487 = vcombine.high %v1442, %v1474
    %v1488 = vcombine.low %v1449, %v1481
    %v1489 = vcombine.high %v1449, %v1481
    %v1490 = vcombine.low %v1074, %v1076
    %v1491 = vcombine.high %v1074, %v1076
    %v1493 = vunpack.c.l.s4 1983009808
    %v1494 = vunpack.c.0.s8 %v1493
    %v1495 = vlaneseq
    %v1496 = vshrl.u32 %v1495, 7
    %v1497 = vsub.s32 %v1494, %v1496
    %v1498 = vrot.slane %v1490, %v1497
    %v1500 = vunpack.c.l.s4 1983009808
    %v1501 = vunpack.c.0.s8 %v1500
    %v1502 = vlaneseq
    %v1503 = vshrl.u32 %v1502, 7
    %v1504 = vsub.s32 %v1501, %v1503
    %v1505 = vrot.slane %v1491, %v1504
    %v1506 = vcombine.low %v1075, %v1077
    %v1507 = vcombine.high %v1075, %v1077
    %v1509 = vunpack.c.l.s4 1983009808
    %v1510 = vunpack.c.0.s8 %v1509
    %v1511 = vlaneseq
    %v1512 = vshrl.u32 %v1511, 7
    %v1513 = vsub.s32 %v1510, %v1512
    %v1514 = vrot.slane %v1506, %v1513
    %v1516 = vunpack.c.l.s4 1983009808
    %v1517 = vunpack.c.0.s8 %v1516
    %v1518 = vlaneseq
    %v1519 = vshrl.u32 %v1518, 7
    %v1520 = vsub.s32 %v1517, %v1519
    %v1521 = vrot.slane %v1507, %v1520
    %v1522 = vcombine.low %v1078, %v1080
    %v1523 = vcombine.high %v1078, %v1080
    %v1525 = vunpack.c.l.s4 1983009808
    %v1526 = vunpack.c.0.s8 %v1525
    %v1527 = vlaneseq
    %v1528 = vshrl.u32 %v1527, 7
    %v1529 = vsub.s32 %v1526, %v1528
    %v1530 = vrot.slane %v1522, %v1529
    %v1532 = vunpack.c.l.s4 1983009808
    %v1533 = vunpack.c.0.s8 %v1532
    %v1534 = vlaneseq
    %v1535 = vshrl.u32 %v1534, 7
    %v1536 = vsub.s32 %v1533, %v1535
    %v1537 = vrot.slane %v1523, %v1536
    %v1538 = vcombine.low %v1079, %v1081
    %v1539 = vcombine.high %v1079, %v1081
    %v1541 = vunpack.c.l.s4 1983009808
    %v1542 = vunpack.c.0.s8 %v1541
    %v1543 = vlaneseq
    %v1544 = vshrl.u32 %v1543, 7
    %v1545 = vsub.s32 %v1542, %v1544
    %v1546 = vrot.slane %v1538, %v1545
    %v1548 = vunpack.c.l.s4 1983009808
    %v1549 = vunpack.c.0.s8 %v1548
    %v1550 = vlaneseq
    %v1551 = vshrl.u32 %v1550, 7
    %v1552 = vsub.s32 %v1549, %v1551
    %v1553 = vrot.slane %v1539, %v1552
    %v1554 = vcombine.low %v1498, %v1514
    %v1555 = vcombine.high %v1498, %v1514
    %v1557 = vunpack.c.l.s4 1934713408
    %v1558 = vunpack.c.0.s8 %v1557
    %v1559 = vlaneseq
    %v1560 = vshrl.u32 %v1559, 7
    %v1561 = vsub.s32 %v1558, %v1560
    %v1562 = vrot.slane %v1554, %v1561
    %v1564 = vunpack.c.l.s4 1934713408
    %v1565 = vunpack.c.0.s8 %v1564
    %v1566 = vlaneseq
    %v1567 = vshrl.u32 %v1566, 7
    %v1568 = vsub.s32 %v1565, %v1567
    %v1569 = vrot.slane %v1555, %v1568
    %v1570 = vcombine.low %v1505, %v1521
    %v1571 = vcombine.high %v1505, %v1521
    %v1573 = vunpack.c.l.s4 1934713408
    %v1574 = vunpack.c.0.s8 %v1573
    %v1575 = vlaneseq
    %v1576 = vshrl.u32 %v1575, 7
    %v1577 = vsub.s32 %v1574, %v1576
    %v1578 = vrot.slane %v1570, %v1577
    %v1580 = vunpack.c.l.s4 1934713408
    %v1581 = vunpack.c.0.s8 %v1580
    %v1582 = vlaneseq
    %v1583 = vshrl.u32 %v1582, 7
    %v1584 = vsub.s32 %v1581, %v1583
    %v1585 = vrot.slane %v1571, %v1584
    %v1586 = vcombine.low %v1530, %v1546
    %v1587 = vcombine.high %v1530, %v1546
    %v1589 = vunpack.c.l.s4 1934713408
    %v1590 = vunpack.c.0.s8 %v1589
    %v1591 = vlaneseq
    %v1592 = vshrl.u32 %v1591, 7
    %v1593 = vsub.s32 %v1590, %v1592
    %v1594 = vrot.slane %v1586, %v1593
    %v1596 = vunpack.c.l.s4 1934713408
    %v1597 = vunpack.c.0.s8 %v1596
    %v1598 = vlaneseq
    %v1599 = vshrl.u32 %v1598, 7
    %v1600 = vsub.s32 %v1597, %v1599
    %v1601 = vrot.slane %v1587, %v1600
    %v1602 = vcombine.low %v1537, %v1553
    %v1603 = vcombine.high %v1537, %v1553
    %v1605 = vunpack.c.l.s4 1934713408
    %v1606 = vunpack.c.0.s8 %v1605
    %v1607 = vlaneseq
    %v1608 = vshrl.u32 %v1607, 7
    %v1609 = vsub.s32 %v1606, %v1608
    %v1610 = vrot.slane %v1602, %v1609
    %v1612 = vunpack.c.l.s4 1934713408
    %v1613 = vunpack.c.0.s8 %v1612
    %v1614 = vlaneseq
    %v1615 = vshrl.u32 %v1614, 7
    %v1616 = vsub.s32 %v1613, %v1615
    %v1617 = vrot.slane %v1603, %v1616
    %v1618 = vcombine.low %v1562, %v1594
    %v1619 = vcombine.high %v1562, %v1594
    %v1620 = vcombine.low %v1569, %v1601
    %v1621 = vcombine.high %v1569, %v1601
    %v1622 = vcombine.low %v1578, %v1610
    %v1623 = vcombine.high %v1578, %v1610
    %v1624 = vcombine.low %v1585, %v1617
    %v1625 = vcombine.high %v1585, %v1617
    %v1626 = vcombine.low %v1210, %v1212
    %v1627 = vcombine.high %v1210, %v1212
    %v1629 = vunpack.c.l.s4 1983009808
    %v1630 = vunpack.c.0.s8 %v1629
    %v1631 = vlaneseq
    %v1632 = vshrl.u32 %v1631, 7
    %v1633 = vsub.s32 %v1630, %v1632
    %v1634 = vrot.slane %v1626, %v1633
    %v1636 = vunpack.c.l.s4 1983009808
    %v1637 = vunpack.c.0.s8 %v1636
    %v1638 = vlaneseq
    %v1639 = vshrl.u32 %v1638, 7
    %v1640 = vsub.s32 %v1637, %v1639
    %v1641 = vrot.slane %v1627, %v1640
    %v1642 = vcombine.low %v1211, %v1213
    %v1643 = vcombine.high %v1211, %v1213
    %v1645 = vunpack.c.l.s4 1983009808
    %v1646 = vunpack.c.0.s8 %v1645
    %v1647 = vlaneseq
    %v1648 = vshrl.u32 %v1647, 7
    %v1649 = vsub.s32 %v1646, %v1648
    %v1650 = vrot.slane %v1642, %v1649
    %v1652 = vunpack.c.l.s4 1983009808
    %v1653 = vunpack.c.0.s8 %v1652
    %v1654 = vlaneseq
    %v1655 = vshrl.u32 %v1654, 7
    %v1656 = vsub.s32 %v1653, %v1655
    %v1657 = vrot.slane %v1643, %v1656
    %v1658 = vcombine.low %v1214, %v1216
    %v1659 = vcombine.high %v1214, %v1216
    %v1661 = vunpack.c.l.s4 1983009808
    %v1662 = vunpack.c.0.s8 %v1661
    %v1663 = vlaneseq
    %v1664 = vshrl.u32 %v1663, 7
    %v1665 = vsub.s32 %v1662, %v1664
    %v1666 = vrot.slane %v1658, %v1665
    %v1668 = vunpack.c.l.s4 1983009808
    %v1669 = vunpack.c.0.s8 %v1668
    %v1670 = vlaneseq
    %v1671 = vshrl.u32 %v1670, 7
    %v1672 = vsub.s32 %v1669, %v1671
    %v1673 = vrot.slane %v1659, %v1672
    %v1674 = vcombine.low %v1215, %v1217
    %v1675 = vcombine.high %v1215, %v1217
    %v1677 = vunpack.c.l.s4 1983009808
    %v1678 = vunpack.c.0.s8 %v1677
    %v1679 = vlaneseq
    %v1680 = vshrl.u32 %v1679, 7
    %v1681 = vsub.s32 %v1678, %v1680
    %v1682 = vrot.slane %v1674, %v1681
    %v1684 = vunpack.c.l.s4 1983009808
    %v1685 = vunpack.c.0.s8 %v1684
    %v1686 = vlaneseq
    %v1687 = vshrl.u32 %v1686, 7
    %v1688 = vsub.s32 %v1685, %v1687
    %v1689 = vrot.slane %v1675, %v1688
    %v1690 = vcombine.low %v1634, %v1650
    %v1691 = vcombine.high %v1634, %v1650
    %v1693 = vunpack.c.l.s4 1934713408
    %v1694 = vunpack.c.0.s8 %v1693
    %v1695 = vlaneseq
    %v1696 = vshrl.u32 %v1695, 7
    %v1697 = vsub.s32 %v1694, %v1696
    %v1698 = vrot.slane %v1690, %v1697
    %v1700 = vunpack.c.l.s4 1934713408
    %v1701 = vunpack.c.0.s8 %v1700
    %v1702 = vlaneseq
    %v1703 = vshrl.u32 %v1702, 7
    %v1704 = vsub.s32 %v1701, %v1703
    %v1705 = vrot.slane %v1691, %v1704
    %v1706 = vcombine.low %v1641, %v1657
    %v1707 = vcombine.high %v1641, %v1657
    %v1709 = vunpack.c.l.s4 1934713408
    %v1710 = vunpack.c.0.s8 %v1709
    %v1711 = vlaneseq
    %v1712 = vshrl.u32 %v1711, 7
    %v1713 = vsub.s32 %v1710, %v1712
    %v1714 = vrot.slane %v1706, %v1713
    %v1716 = vunpack.c.l.s4 1934713408
    %v1717 = vunpack.c.0.s8 %v1716
    %v1718 = vlaneseq
    %v1719 = vshrl.u32 %v1718, 7
    %v1720 = vsub.s32 %v1717, %v1719
    %v1721 = vrot.slane %v1707, %v1720
    %v1722 = vcombine.low %v1666, %v1682
    %v1723 = vcombine.high %v1666, %v1682
    %v1725 = vunpack.c.l.s4 1934713408
    %v1726 = vunpack.c.0.s8 %v1725
    %v1727 = vlaneseq
    %v1728 = vshrl.u32 %v1727, 7
    %v1729 = vsub.s32 %v1726, %v1728
    %v1730 = vrot.slane %v1722, %v1729
    %v1732 = vunpack.c.l.s4 1934713408
    %v1733 = vunpack.c.0.s8 %v1732
    %v1734 = vlaneseq
    %v1735 = vshrl.u32 %v1734, 7
    %v1736 = vsub.s32 %v1733, %v1735
    %v1737 = vrot.slane %v1723, %v1736
    %v1738 = vcombine.low %v1673, %v1689
    %v1739 = vcombine.high %v1673, %v1689
    %v1741 = vunpack.c.l.s4 1934713408
    %v1742 = vunpack.c.0.s8 %v1741
    %v1743 = vlaneseq
    %v1744 = vshrl.u32 %v1743, 7
    %v1745 = vsub.s32 %v1742, %v1744
    %v1746 = vrot.slane %v1738, %v1745
    %v1748 = vunpack.c.l.s4 1934713408
    %v1749 = vunpack.c.0.s8 %v1748
    %v1750 = vlaneseq
    %v1751 = vshrl.u32 %v1750, 7
    %v1752 = vsub.s32 %v1749, %v1751
    %v1753 = vrot.slane %v1739, %v1752
    %v1754 = vcombine.low %v1698, %v1730
    %v1755 = vcombine.high %v1698, %v1730
    %v1756 = vcombine.low %v1705, %v1737
    %v1757 = vcombine.high %v1705, %v1737
    %v1758 = vcombine.low %v1714, %v1746
    %v1759 = vcombine.high %v1714, %v1746
    %v1760 = vcombine.low %v1721, %v1753
    %v1761 = vcombine.high %v1721, %v1753
    %v1762 = vcombine.low %v1346, %v1348
    %v1763 = vcombine.high %v1346, %v1348
    %v1765 = vunpack.c.l.s4 1983009808
    %v1766 = vunpack.c.0.s8 %v1765
    %v1767 = vlaneseq
    %v1768 = vshrl.u32 %v1767, 7
    %v1769 = vsub.s32 %v1766, %v1768
    %v1770 = vrot.slane %v1762, %v1769
    %v1772 = vunpack.c.l.s4 1983009808
    %v1773 = vunpack.c.0.s8 %v1772
    %v1774 = vlaneseq
    %v1775 = vshrl.u32 %v1774, 7
    %v1776 = vsub.s32 %v1773, %v1775
    %v1777 = vrot.slane %v1763, %v1776
    %v1778 = vcombine.low %v1347, %v1349
    %v1779 = vcombine.high %v1347, %v1349
    %v1781 = vunpack.c.l.s4 1983009808
    %v1782 = vunpack.c.0.s8 %v1781
    %v1783 = vlaneseq
    %v1784 = vshrl.u32 %v1783, 7
    %v1785 = vsub.s32 %v1782, %v1784
    %v1786 = vrot.slane %v1778, %v1785
    %v1788 = vunpack.c.l.s4 1983009808
    %v1789 = vunpack.c.0.s8 %v1788
    %v1790 = vlaneseq
    %v1791 = vshrl.u32 %v1790, 7
    %v1792 = vsub.s32 %v1789, %v1791
    %v1793 = vrot.slane %v1779, %v1792
    %v1794 = vcombine.low %v1350, %v1352
    %v1795 = vcombine.high %v1350, %v1352
    %v1797 = vunpack.c.l.s4 1983009808
    %v1798 = vunpack.c.0.s8 %v1797
    %v1799 = vlaneseq
    %v1800 = vshrl.u32 %v1799, 7
    %v1801 = vsub.s32 %v1798, %v1800
    %v1802 = vrot.slane %v1794, %v1801
    %v1804 = vunpack.c.l.s4 1983009808
    %v1805 = vunpack.c.0.s8 %v1804
    %v1806 = vlaneseq
    %v1807 = vshrl.u32 %v1806, 7
    %v1808 = vsub.s32 %v1805, %v1807
    %v1809 = vrot.slane %v1795, %v1808
    %v1810 = vcombine.low %v1351, %v1353
    %v1811 = vcombine.high %v1351, %v1353
    %v1813 = vunpack.c.l.s4 1983009808
    %v1814 = vunpack.c.0.s8 %v1813
    %v1815 = vlaneseq
    %v1816 = vshrl.u32 %v1815, 7
    %v1817 = vsub.s32 %v1814, %v1816
    %v1818 = vrot.slane %v1810, %v1817
    %v1820 = vunpack.c.l.s4 1983009808
    %v1821 = vunpack.c.0.s8 %v1820
    %v1822 = vlaneseq
    %v1823 = vshrl.u32 %v1822, 7
    %v1824 = vsub.s32 %v1821, %v1823
    %v1825 = vrot.slane %v1811, %v1824
    %v1826 = vcombine.low %v1770, %v1786
    %v1827 = vcombine.high %v1770, %v1786
    %v1829 = vunpack.c.l.s4 1934713408
    %v1830 = vunpack.c.0.s8 %v1829
    %v1831 = vlaneseq
    %v1832 = vshrl.u32 %v1831, 7
    %v1833 = vsub.s32 %v1830, %v1832
    %v1834 = vrot.slane %v1826, %v1833
    %v1836 = vunpack.c.l.s4 1934713408
    %v1837 = vunpack.c.0.s8 %v1836
    %v1838 = vlaneseq
    %v1839 = vshrl.u32 %v1838, 7
    %v1840 = vsub.s32 %v1837, %v1839
    %v1841 = vrot.slane %v1827, %v1840
    %v1842 = vcombine.low %v1777, %v1793
    %v1843 = vcombine.high %v1777, %v1793
    %v1845 = vunpack.c.l.s4 1934713408
    %v1846 = vunpack.c.0.s8 %v1845
    %v1847 = vlaneseq
    %v1848 = vshrl.u32 %v1847, 7
    %v1849 = vsub.s32 %v1846, %v1848
    %v1850 = vrot.slane %v1842, %v1849
    %v1852 = vunpack.c.l.s4 1934713408
    %v1853 = vunpack.c.0.s8 %v1852
    %v1854 = vlaneseq
    %v1855 = vshrl.u32 %v1854, 7
    %v1856 = vsub.s32 %v1853, %v1855
    %v1857 = vrot.slane %v1843, %v1856
    %v1858 = vcombine.low %v1802, %v1818
    %v1859 = vcombine.high %v1802, %v1818
    %v1861 = vunpack.c.l.s4 1934713408
    %v1862 = vunpack.c.0.s8 %v1861
    %v1863 = vlaneseq
    %v1864 = vshrl.u32 %v1863, 7
    %v1865 = vsub.s32 %v1862, %v1864
    %v1866 = vrot.slane %v1858, %v1865
    %v1868 = vunpack.c.l.s4 1934713408
    %v1869 = vunpack.c.0.s8 %v1868
    %v1870 = vlaneseq
    %v1871 = vshrl.u32 %v1870, 7
    %v1872 = vsub.s32 %v1869, %v1871
    %v1873 = vrot.slane %v1859, %v1872
    %v1874 = vcombine.low %v1809, %v1825
    %v1875 = vcombine.high %v1809, %v1825
    %v1877 = vunpack.c.l.s4 1934713408
    %v1878 = vunpack.c.0.s8 %v1877
    %v1879 = vlaneseq
    %v1880 = vshrl.u32 %v1879, 7
    %v1881 = vsub.s32 %v1878, %v1880
    %v1882 = vrot.slane %v1874, %v1881
    %v1884 = vunpack.c.l.s4 1934713408
    %v1885 = vunpack.c.0.s8 %v1884
    %v1886 = vlaneseq
    %v1887 = vshrl.u32 %v1886, 7
    %v1888 = vsub.s32 %v1885, %v1887
    %v1889 = vrot.slane %v1875, %v1888
    %v1890 = vcombine.low %v1834, %v1866
    %v1891 = vcombine.high %v1834, %v1866
    %v1892 = vcombine.low %v1841, %v1873
    %v1893 = vcombine.high %v1841, %v1873
    %v1894 = vcombine.low %v1850, %v1882
    %v1895 = vcombine.high %v1850, %v1882
    %v1896 = vcombine.low %v1857, %v1889
    %v1897 = vcombine.high %v1857, %v1889
    %v1898 = vcombine.low %v1482, %v1484
    %v1899 = vcombine.high %v1482, %v1484
    %v1901 = vunpack.c.l.s4 1983009808
    %v1902 = vunpack.c.0.s8 %v1901
    %v1903 = vlaneseq
    %v1904 = vshrl.u32 %v1903, 7
    %v1905 = vsub.s32 %v1902, %v1904
    %v1906 = vrot.slane %v1898, %v1905
    %v1908 = vunpack.c.l.s4 1983009808
    %v1909 = vunpack.c.0.s8 %v1908
    %v1910 = vlaneseq
    %v1911 = vshrl.u32 %v1910, 7
    %v1912 = vsub.s32 %v1909, %v1911
    %v1913 = vrot.slane %v1899, %v1912
    %v1914 = vcombine.low %v1483, %v1485
    %v1915 = vcombine.high %v1483, %v1485
    %v1917 = vunpack.c.l.s4 1983009808
    %v1918 = vunpack.c.0.s8 %v1917
    %v1919 = vlaneseq
    %v1920 = vshrl.u32 %v1919, 7
    %v1921 = vsub.s32 %v1918, %v1920
    %v1922 = vrot.slane %v1914, %v1921
    %v1924 = vunpack.c.l.s4 1983009808
    %v1925 = vunpack.c.0.s8 %v1924
    %v1926 = vlaneseq
    %v1927 = vshrl.u32 %v1926, 7
    %v1928 = vsub.s32 %v1925, %v1927
    %v1929 = vrot.slane %v1915, %v1928
    %v1930 = vcombine.low %v1486, %v1488
    %v1931 = vcombine.high %v1486, %v1488
    %v1933 = vunpack.c.l.s4 1983009808
    %v1934 = vunpack.c.0.s8 %v1933
    %v1935 = vlaneseq
    %v1936 = vshrl.u32 %v1935, 7
    %v1937 = vsub.s32 %v1934, %v1936
    %v1938 = vrot.slane %v1930, %v1937
    %v1940 = vunpack.c.l.s4 1983009808
    %v1941 = vunpack.c.0.s8 %v1940
    %v1942 = vlaneseq
    %v1943 = vshrl.u32 %v1942, 7
    %v1944 = vsub.s32 %v1941, %v1943
    %v1945 = vrot.slane %v1931, %v1944
    %v1946 = vcombine.low %v1487, %v1489
    %v1947 = vcombine.high %v1487, %v1489
    %v1949 = vunpack.c.l.s4 1983009808
    %v1950 = vunpack.c.0.s8 %v1949
    %v1951 = vlaneseq
    %v1952 = vshrl.u32 %v1951, 7
    %v1953 = vsub.s32 %v1950, %v1952
    %v1954 = vrot.slane %v1946, %v1953
    %v1956 = vunpack.c.l.s4 1983009808
    %v1957 = vunpack.c.0.s8 %v1956
    %v1958 = vlaneseq
    %v1959 = vshrl.u32 %v1958, 7
    %v1960 = vsub.s32 %v1957, %v1959
    %v1961 = vrot.slane %v1947, %v1960
    %v1962 = vcombine.low %v1906, %v1922
    %v1963 = vcombine.high %v1906, %v1922
    %v1965 = vunpack.c.l.s4 1934713408
    %v1966 = vunpack.c.0.s8 %v1965
    %v1967 = vlaneseq
    %v1968 = vshrl.u32 %v1967, 7
    %v1969 = vsub.s32 %v1966, %v1968
    %v1970 = vrot.slane %v1962, %v1969
    %v1972 = vunpack.c.l.s4 1934713408
    %v1973 = vunpack.c.0.s8 %v1972
    %v1974 = vlaneseq
    %v1975 = vshrl.u32 %v1974, 7
    %v1976 = vsub.s32 %v1973, %v1975
    %v1977 = vrot.slane %v1963, %v1976
    %v1978 = vcombine.low %v1913, %v1929
    %v1979 = vcombine.high %v1913, %v1929
    %v1981 = vunpack.c.l.s4 1934713408
    %v1982 = vunpack.c.0.s8 %v1981
    %v1983 = vlaneseq
    %v1984 = vshrl.u32 %v1983, 7
    %v1985 = vsub.s32 %v1982, %v1984
    %v1986 = vrot.slane %v1978, %v1985
    %v1988 = vunpack.c.l.s4 1934713408
    %v1989 = vunpack.c.0.s8 %v1988
    %v1990 = vlaneseq
    %v1991 = vshrl.u32 %v1990, 7
    %v1992 = vsub.s32 %v1989, %v1991
    %v1993 = vrot.slane %v1979, %v1992
    %v1994 = vcombine.low %v1938, %v1954
    %v1995 = vcombine.high %v1938, %v1954
    %v1997 = vunpack.c.l.s4 1934713408
    %v1998 = vunpack.c.0.s8 %v1997
    %v1999 = vlaneseq
    %v2000 = vshrl.u32 %v1999, 7
    %v2001 = vsub.s32 %v1998, %v2000
    %v2002 = vrot.slane %v1994, %v2001
    %v2004 = vunpack.c.l.s4 1934713408
    %v2005 = vunpack.c.0.s8 %v2004
    %v2006 = vlaneseq
    %v2007 = vshrl.u32 %v2006, 7
    %v2008 = vsub.s32 %v2005, %v2007
    %v2009 = vrot.slane %v1995, %v2008
    %v2010 = vcombine.low %v1945, %v1961
    %v2011 = vcombine.high %v1945, %v1961
    %v2013 = vunpack.c.l.s4 1934713408
    %v2014 = vunpack.c.0.s8 %v2013
    %v2015 = vlaneseq
    %v2016 = vshrl.u32 %v2015, 7
    %v2017 = vsub.s32 %v2014, %v2016
    %v2018 = vrot.slane %v2010, %v2017
    %v2020 = vunpack.c.l.s4 1934713408
    %v2021 = vunpack.c.0.s8 %v2020
    %v2022 = vlaneseq
    %v2023 = vshrl.u32 %v2022, 7
    %v2024 = vsub.s32 %v2021, %v2023
    %v2025 = vrot.slane %v2011, %v2024
    %v2026 = vcombine.low %v1970, %v2002
    %v2027 = vcombine.high %v1970, %v2002
    %v2028 = vcombine.low %v1977, %v2009
    %v2029 = vcombine.high %v1977, %v2009
    %v2030 = vcombine.low %v1986, %v2018
    %v2031 = vcombine.high %v1986, %v2018
    %v2032 = vcombine.low %v1993, %v2025
    %v2033 = vcombine.high %v1993, %v2025
    %v2034 = vpack.c.bf16 %v1754, %v1618
    %v2035 = vpack.c.bf16 %v2026, %v1890
    %v2036 = vpack.c.bf16 %v1755, %v1619
    %v2037 = vpack.c.bf16 %v2027, %v1891
    %v2038 = vpack.c.bf16 %v1756, %v1620
    %v2039 = vpack.c.bf16 %v2028, %v1892
    %v2040 = vpack.c.bf16 %v1757, %v1621
    %v2041 = vpack.c.bf16 %v2029, %v1893
    %v2042 = vpack.c.bf16 %v1758, %v1622
    %v2043 = vpack.c.bf16 %v2030, %v1894
    %v2044 = vpack.c.bf16 %v1759, %v1623
    %v2045 = vpack.c.bf16 %v2031, %v1895
    %v2046 = vpack.c.bf16 %v1760, %v1624
    %v2047 = vpack.c.bf16 %v2032, %v1896
    %v2048 = vpack.c.bf16 %v1761, %v1625
    %v2049 = vpack.c.bf16 %v2033, %v1897
    %v2066 = vunpack.c.l.b16 %v2034
    %v2067 = vunpack.c.h.b16 %v2034
    %v2068 = vunpack.c.l.b16 %v2035
    %v2069 = vunpack.c.h.b16 %v2035
    %v2070 = vunpack.c.l.b16 %v2036
    %v2071 = vunpack.c.h.b16 %v2036
    %v2072 = vunpack.c.l.b16 %v2037
    %v2073 = vunpack.c.h.b16 %v2037
    %v2074 = vunpack.c.l.b16 %v2038
    %v2075 = vunpack.c.h.b16 %v2038
    %v2076 = vunpack.c.l.b16 %v2039
    %v2077 = vunpack.c.h.b16 %v2039
    %v2078 = vunpack.c.l.b16 %v2040
    %v2079 = vunpack.c.h.b16 %v2040
    %v2080 = vunpack.c.l.b16 %v2041
    %v2081 = vunpack.c.h.b16 %v2041
    %v2082 = vunpack.c.l.b16 %v2042
    %v2083 = vunpack.c.h.b16 %v2042
    %v2084 = vunpack.c.l.b16 %v2043
    %v2085 = vunpack.c.h.b16 %v2043
    %v2086 = vunpack.c.l.b16 %v2044
    %v2087 = vunpack.c.h.b16 %v2044
    %v2088 = vunpack.c.l.b16 %v2045
    %v2089 = vunpack.c.h.b16 %v2045
    %v2090 = vunpack.c.l.b16 %v2046
    %v2091 = vunpack.c.h.b16 %v2046
    %v2092 = vunpack.c.l.b16 %v2047
    %v2093 = vunpack.c.h.b16 %v2047
    %v2094 = vunpack.c.l.b16 %v2048
    %v2095 = vunpack.c.h.b16 %v2048
    %v2096 = vunpack.c.l.b16 %v2049
    %v2097 = vunpack.c.h.b16 %v2049
    %v2098 = vpack.c.b16 %v2066, %v2066
    %v2099 = vpack.c.b16 %v2067, %v2067
    %v2100 = vpack.c.b16 %v2068, %v2068
    %v2101 = vpack.c.b16 %v2069, %v2069
    %v2102 = vpack.c.b16 %v2070, %v2070
    %v2103 = vpack.c.b16 %v2071, %v2071
    %v2104 = vpack.c.b16 %v2072, %v2072
    %v2105 = vpack.c.b16 %v2073, %v2073
    %v2106 = vpack.c.b16 %v2074, %v2074
    %v2107 = vpack.c.b16 %v2075, %v2075
    %v2108 = vpack.c.b16 %v2076, %v2076
    %v2109 = vpack.c.b16 %v2077, %v2077
    %v2110 = vpack.c.b16 %v2078, %v2078
    %v2111 = vpack.c.b16 %v2079, %v2079
    %v2112 = vpack.c.b16 %v2080, %v2080
    %v2113 = vpack.c.b16 %v2081, %v2081
    %v2114 = vpack.c.b16 %v2082, %v2082
    %v2115 = vpack.c.b16 %v2083, %v2083
    %v2116 = vpack.c.b16 %v2084, %v2084
    %v2117 = vpack.c.b16 %v2085, %v2085
    %v2118 = vpack.c.b16 %v2086, %v2086
    %v2119 = vpack.c.b16 %v2087, %v2087
    %v2120 = vpack.c.b16 %v2088, %v2088
    %v2121 = vpack.c.b16 %v2089, %v2089
    %v2122 = vpack.c.b16 %v2090, %v2090
    %v2123 = vpack.c.b16 %v2091, %v2091
    %v2124 = vpack.c.b16 %v2092, %v2092
    %v2125 = vpack.c.b16 %v2093, %v2093
    %v2126 = vpack.c.b16 %v2094, %v2094
    %v2127 = vpack.c.b16 %v2095, %v2095
    %v2128 = vpack.c.b16 %v2096, %v2096
    %v2129 = vpack.c.b16 %v2097, %v2097
    %vm2162 = vcmask 257024
    %2163 = vst.msk [vmem:[#allocation5] sm:$0xf] %vm2162, %v2098
    %2164 = vst.msk [vmem:[#allocation5 + $0x4] sm:$0xf] %vm2162, %v2099
    %2165 = vst.msk [vmem:[#allocation5 + $0x8] sm:$0xf] %vm2162, %v2100
    %2166 = vst.msk [vmem:[#allocation5 + $0xc] sm:$0xf] %vm2162, %v2101
    %2167 = vst.msk [vmem:[#allocation5 + $0x10] sm:$0xf] %vm2162, %v2102
    %2168 = vst.msk [vmem:[#allocation5 + $0x14] sm:$0xf] %vm2162, %v2103
    %2169 = vst.msk [vmem:[#allocation5 + $0x18] sm:$0xf] %vm2162, %v2104
    %2170 = vst.msk [vmem:[#allocation5 + $0x1c] sm:$0xf] %vm2162, %v2105
    %2171 = vst.msk [vmem:[#allocation5 + $0x20] sm:$0xf] %vm2162, %v2106
    %2172 = vst.msk [vmem:[#allocation5 + $0x24] sm:$0xf] %vm2162, %v2107
    %2173 = vst.msk [vmem:[#allocation5 + $0x28] sm:$0xf] %vm2162, %v2108
    %2174 = vst.msk [vmem:[#allocation5 + $0x2c] sm:$0xf] %vm2162, %v2109
    %2175 = vst.msk [vmem:[#allocation5 + $0x30] sm:$0xf] %vm2162, %v2110
    %2176 = vst.msk [vmem:[#allocation5 + $0x34] sm:$0xf] %vm2162, %v2111
    %2177 = vst.msk [vmem:[#allocation5 + $0x38] sm:$0xf] %vm2162, %v2112
    %2178 = vst.msk [vmem:[#allocation5 + $0x3c] sm:$0xf] %vm2162, %v2113
    %2179 = vst.msk [vmem:[#allocation5 + $0x40] sm:$0xf] %vm2162, %v2114
    %2180 = vst.msk [vmem:[#allocation5 + $0x44] sm:$0xf] %vm2162, %v2115
    %2181 = vst.msk [vmem:[#allocation5 + $0x48] sm:$0xf] %vm2162, %v2116
    %2182 = vst.msk [vmem:[#allocation5 + $0x4c] sm:$0xf] %vm2162, %v2117
    %2183 = vst.msk [vmem:[#allocation5 + $0x50] sm:$0xf] %vm2162, %v2118
    %2184 = vst.msk [vmem:[#allocation5 + $0x54] sm:$0xf] %vm2162, %v2119
    %2185 = vst.msk [vmem:[#allocation5 + $0x58] sm:$0xf] %vm2162, %v2120
    %2186 = vst.msk [vmem:[#allocation5 + $0x5c] sm:$0xf] %vm2162, %v2121
    %2187 = vst.msk [vmem:[#allocation5 + $0x60] sm:$0xf] %vm2162, %v2122
    %2188 = vst.msk [vmem:[#allocation5 + $0x64] sm:$0xf] %vm2162, %v2123
    %2189 = vst.msk [vmem:[#allocation5 + $0x68] sm:$0xf] %vm2162, %v2124
    %2190 = vst.msk [vmem:[#allocation5 + $0x6c] sm:$0xf] %vm2162, %v2125
    %2191 = vst.msk [vmem:[#allocation5 + $0x70] sm:$0xf] %vm2162, %v2126
    %2192 = vst.msk [vmem:[#allocation5 + $0x74] sm:$0xf] %vm2162, %v2127
    %2193 = vst.msk [vmem:[#allocation5 + $0x78] sm:$0xf] %vm2162, %v2128
    %2194 = vst.msk [vmem:[#allocation5 + $0x7c] sm:$0xf] %vm2162, %v2129
    // Predicated region
    $region18: #{tpu_custom_call.1} parent=1 // pred_check
      _
    $region19: #{tpu_custom_call.1} parent=1 // pred_check_branch
      %2196 = sbr.rel (0) target = $region21
    $region20: #{tpu_custom_call.1} parent=1 // pred_region
      %s2198 = ssub.s32 2048, 2048
      %2199 = vsyncadd [#allocation4], %s2198
      %s2200 = sshll.u32 [#allocation5], 4
      %s2201 = int_to_ptr.vmem [resolvable:$true] %s2200
      %2206 = dma.vmem_to_hbm [thread:$0]  %s2201, 2048, %s3, [#allocation4], 64, 64, 4
    $region21: #{tpu_custom_call.1} parent=1 // pred_fallthru
      _
    // Predicated region
    $region22: #{tpu_custom_call.1} parent=1 // pred_check
      _
    $region23: #{tpu_custom_call.1} parent=1 // pred_check_branch
      %2208 = sbr.rel (0) target = $region25
    $region24: #{tpu_custom_call.1} parent=1 // pred_region
      %2209 = dma.done [#allocation4], 2048
    $region25: #{tpu_custom_call.1} parent=1 // pred_fallthru
      _
    %2210 = vsyncpa [#allocation3], 1
    %2211 = vsyncpa [#allocation4], 1

</llo_original>
